<compile_context>
chip_gen: v6e
topology: v6e:2x2x1
jax: 0.10.0
libtpu: 0.0.40
codegen_flags: <defaults>
</compile_context>

<pallas_src>
import functools

import jax
import jax.numpy as jnp
from jax.experimental import pallas as pl
from jax.experimental.pallas import tpu as pltpu


# ----------------------------------------------------------------------------
# Pallas kernel 1: tiled token-major encoder for both views / both encoders,
#                  + F.normalize over C, + positive logits (l_pos) hoisted here.
# ----------------------------------------------------------------------------
def _encoder_kernel(x_ref, wqt_ref, bq_ref, wkt_ref, bk_ref,
                    qbf_ref, kbf_ref, q1_ref, lpos_ref):
    # x_ref: (2, tile_t*N, C_in) ; w*t: (C_in, C) ; b*: (1, C)
    wq = wqt_ref[...]
    bq = bq_ref[...]
    wk = wkt_ref[...]
    bk = bk_ref[...]
    tb, two_n, c_feat = qbf_ref.shape
    nn = two_n // 2

    def enc(x, w, b):
        # f32 MXU matmul (tiny vs. the queue stream); normalize over C (lane axis)
        f = jnp.dot(x, w, preferred_element_type=jnp.float32) + b        # (mB, C)
        ss = jnp.sum(f * f, axis=-1, keepdims=True)                      # (mB, 1)
        # single rsqrt == f / max(||f||, 1e-12)  (F.normalize semantics)
        return f * jax.lax.rsqrt(jnp.maximum(ss, 1e-24))

    x1 = x_ref[0]                                                        # view 1 tokens
    x2 = x_ref[1]                                                        # view 2 tokens
    q1 = enc(x1, wq, bq)
    q2 = enc(x2, wq, bq)
    k1 = enc(x1, wk, bk)
    k2 = enc(x2, wk, bk)

    # positive logits while C is lane-dense: direction 0 = q1.k2, direction 1 = q2.k1
    lp0 = jnp.sum(q1 * k2, axis=-1, keepdims=True)                       # (mB, 1)
    lp1 = jnp.sum(q2 * k1, axis=-1, keepdims=True)

    q1r = q1.reshape(tb, nn, c_feat)
    q2r = q2.reshape(tb, nn, c_feat)
    k1r = k1.reshape(tb, nn, c_feat)
    k2r = k2.reshape(tb, nn, c_feat)

    qbf_ref[:, :nn, :] = q1r.astype(jnp.bfloat16)                        # d=0 rows
    qbf_ref[:, nn:, :] = q2r.astype(jnp.bfloat16)                        # d=1 rows
    kbf_ref[:, :nn, :] = k1r.astype(jnp.bfloat16)                        # enqueue order [k1|k2]
    kbf_ref[:, nn:, :] = k2r.astype(jnp.bfloat16)
    q1_ref[...] = q1r                                                    # returned query feats
    lpos_ref[:, :nn, :] = lp0.reshape(tb, nn, 1)
    lpos_ref[:, nn:, :] = lp1.reshape(tb, nn, 1)


def encode_both(x_all, wq, bq, wk, bk, *, n, t, tile_t=None):
    """x_all: (2, T*N, C_in) token-major.  Returns (q_bf, k_bf, q1, l_pos)."""
    c, c_in = wq.shape
    if tile_t is None:
        tile_t = t // 2 if (t % 2 == 0 and ((t // 2) * n) % 8 == 0) else t
    assert t % tile_t == 0, "time_steps must be divisible by the encoder T tile"
    m_blk = tile_t * n

    wqt = wq.T
    wkt = wk.T
    bq_r = bq.reshape(1, c)
    bk_r = bk.reshape(1, c)

    out_shapes = (
        jax.ShapeDtypeStruct((t, 2 * n, c), jnp.bfloat16),   # q_bf (loss-kernel layout)
        jax.ShapeDtypeStruct((t, 2 * n, c), jnp.bfloat16),   # k_bf (for enqueue)
        jax.ShapeDtypeStruct((t, n, c), jnp.float32),        # q1   (forward output)
        jax.ShapeDtypeStruct((t, 2 * n, 1), jnp.float32),    # l_pos
    )
    return pl.pallas_call(
        _encoder_kernel,
        out_shape=out_shapes,
        grid_spec=pltpu.PrefetchScalarGridSpec(
            num_scalar_prefetch=0,
            grid=(t // tile_t,),
            in_specs=[
                pl.BlockSpec((2, m_blk, c_in), lambda i: (0, i, 0)),     # token blocks
                pl.BlockSpec((c_in, c), lambda i: (0, 0)),               # Wq^T resident
                pl.BlockSpec((1, c), lambda i: (0, 0)),
                pl.BlockSpec((c_in, c), lambda i: (0, 0)),               # Wk^T resident
                pl.BlockSpec((1, c), lambda i: (0, 0)),
            ],
            out_specs=[
                pl.BlockSpec((tile_t, 2 * n, c), lambda i: (i, 0, 0)),
                pl.BlockSpec((tile_t, 2 * n, c), lambda i: (i, 0, 0)),
                pl.BlockSpec((tile_t, n, c), lambda i: (i, 0, 0)),
                pl.BlockSpec((tile_t, 2 * n, 1), lambda i: (i, 0, 0)),
            ],
        ),
        compiler_params=pltpu.CompilerParams(dimension_semantics=("parallel",)),
    )(x_all, wqt, bq_r, wkt, bk_r)


# ----------------------------------------------------------------------------
# Pallas kernel 2: symmetric contrastive loss.
#   grid = (T blocks "parallel", K blocks "arbitrary")
#   l_neg = q_bf(Tt,2N,C) @ queue_bf(Tt,C,Kt)  (one fused MXU dot, f32 accumulate)
#   online logsumexp over K; l_pos folded in at the last K step; per-T-block CE sums.
# ----------------------------------------------------------------------------
def _loss_kernel(qbf_ref, lpos_ref, queue_ref, out_ref, m_scr, s_scr, *, inv_temp):
    kk = pl.program_id(1)

    @pl.when(kk == 0)
    def _init():
        m_scr[...] = jnp.full_like(m_scr, -jnp.inf)
        s_scr[...] = jnp.zeros_like(s_scr)

    # (Tt, 2N, C) bf16 x (Tt, C, Kt) bf16 -> (Tt, 2N, Kt) f32
    l_neg = jax.lax.dot_general(
        qbf_ref[...], queue_ref[...],
        dimension_numbers=(((2,), (1,)), ((0,), (0,))),
        preferred_element_type=jnp.float32) * inv_temp
    m_old = m_scr[...]
    m_new = jnp.maximum(m_old, jnp.max(l_neg, axis=-1, keepdims=True))
    s_scr[...] = (s_scr[...] * jnp.exp(m_old - m_new)
                  + jnp.sum(jnp.exp(l_neg - m_new), axis=-1, keepdims=True))
    m_scr[...] = m_new

    @pl.when(kk == pl.num_programs(1) - 1)
    def _finalize():
        l_pos = lpos_ref[...] * inv_temp                                 # (Tt, 2N, 1)
        m_f = jnp.maximum(m_scr[...], l_pos)
        s_f = s_scr[...] * jnp.exp(m_scr[...] - m_f) + jnp.exp(l_pos - m_f)
        ce = m_f + jnp.log(s_f) - l_pos                                  # (Tt, 2N, 1)
        out_ref[...] = jnp.sum(ce, axis=(0, 1), keepdims=True)           # (1, 1, 1)


def _pick_tile_k(k_total, c, tile_t, budget_bytes=4 << 20):
    """Largest power-of-two K tile (>=128, dividing K) whose bf16 slab fits the budget."""
    if tile_t * c * k_total * 2 <= budget_bytes:
        return k_total                      # whole queue slab fits -> grid of 1 K step
    best = 128 if k_total % 128 == 0 else k_total
    cand = 128
    while cand <= k_total:
        if k_total % cand == 0 and tile_t * c * cand * 2 <= budget_bytes:
            best = cand
        cand *= 2
    return best


def contrastive_losses(q_bf, l_pos, queue_bf, temp, *, tile_t=None, tile_k=None):
    """q_bf: (T, 2N, C) bf16; l_pos: (T, 2N, 1) f32; queue_bf: (T, C, K) bf16.
    Returns the scalar symmetric loss (loss_12 + loss_21)."""
    t, two_n, c = q_bf.shape
    n = two_n // 2
    k_total = queue_bf.shape[-1]
    if tile_t is None:
        tile_t = t // 2 if t % 2 == 0 else t
    assert t % tile_t == 0, "time_steps must be divisible by the loss T tile"
    if tile_k is None:
        tile_k = _pick_tile_k(k_total, c, tile_t)
    assert k_total % tile_k == 0, "queue size must be divisible by the K tile"
    num_tb = t // tile_t

    kern = functools.partial(_loss_kernel, inv_temp=float(1.0 / temp))
    partials = pl.pallas_call(
        kern,
        out_shape=jax.ShapeDtypeStruct((num_tb, 1, 1), jnp.float32),
        grid_spec=pltpu.PrefetchScalarGridSpec(
            num_scalar_prefetch=0,
            grid=(num_tb, k_total // tile_k),
            in_specs=[
                pl.BlockSpec((tile_t, two_n, c), lambda ti, kk: (ti, 0, 0)),    # q (bf16, resident over K)
                pl.BlockSpec((tile_t, two_n, 1), lambda ti, kk: (ti, 0, 0)),    # l_pos
                pl.BlockSpec((tile_t, c, tile_k), lambda ti, kk: (ti, 0, kk)),  # queue K tile (bf16)
            ],
            out_specs=pl.BlockSpec((1, 1, 1), lambda ti, kk: (ti, 0, 0)),
            scratch_shapes=[pltpu.VMEM((tile_t, two_n, 1), jnp.float32),        # running max
                            pltpu.VMEM((tile_t, two_n, 1), jnp.float32)],       # running sum
        ),
        # T blocks are independent ("parallel" -> both v7x TensorCores get work,
        # each with its own output block + scratch); K is the reduction ("arbitrary").
        compiler_params=pltpu.CompilerParams(
            dimension_semantics=("parallel", "arbitrary"),
            vmem_limit_bytes=32 * 1024 * 1024),
        # TODO(synk): pipeline_mode=pl.Buffered(1) on the resident q/l_pos specs would
        # reclaim one buffer copy on v7x's 64 MiB VMEM; left at the default depth here.
    )(q_bf, l_pos, queue_bf)
    # CE mean over (N, T) per direction, summed over the two symmetric directions.
    return jnp.sum(partials) / (n * t)


# ----------------------------------------------------------------------------
# MoCo forward (symmetric=True), functional version of the PyTorch module.
# ----------------------------------------------------------------------------
def moco_forward(im1, im2, params_q, params_k, queue, queue_ptr, *, m, temp,
                 tile_t_enc=None, tile_t_loss=None, tile_k=None):
    n, c_in, t = im1.shape
    k_total = queue.shape[-1]

    # momentum update of the key encoder (no_grad in the reference)
    params_k = jax.tree.map(lambda pk, pq: pk * m + pq * (1.0 - m),
                            params_k, params_q)

    # token-major layout: (N, C_in, T) -> (T*N, C_in); stack the two views
    def tok(x):
        return jnp.transpose(x, (2, 0, 1)).reshape(t * n, c_in)
    x_all = jnp.stack([tok(im1), tok(im2)], axis=0)              # (2, T*N, C_in)

    # --- one tiled, lane-dense encoder call: features + l_pos in loss layout ---
    q_bf, k_bf, q1, l_pos = encode_both(
        x_all, params_q["w"], params_q["b"], params_k["w"], params_k["b"],
        n=n, t=t, tile_t=tile_t_enc)
    k_bf = jax.lax.stop_gradient(k_bf)                           # keys are no_grad
    # TODO(synk): _batch_shuffle/_unshuffle are exact no-ops here — the synthetic
    # linear encoder has no BatchNorm, so shuffle+unshuffle is the identity; omitted.
    # TODO(synk): forward-only — a custom_vjp for the loss pallas_call would be
    # needed to train through it.

    # --- symmetric contrastive loss (one K-tiled pallas_call, scalar result) ---
    loss = contrastive_losses(q_bf, l_pos, queue, temp,
                              tile_t=tile_t_loss, tile_k=tile_k)

    q_out = jnp.transpose(q1, (1, 2, 0))                         # (N, C, T) query feats

    # --- dequeue & enqueue: wrap-around-safe scatter on the (T, C, K) bf16 queue ---
    keys_tck = jnp.transpose(k_bf, (0, 2, 1))                    # (T, C, 2N), order [k1|k2]
    idx = (queue_ptr + jnp.arange(2 * n)) % k_total
    queue = queue.at[:, :, idx].set(keys_tck.astype(queue.dtype))
    queue_ptr = (queue_ptr + 2 * n) % k_total

    return (q_out, [loss]), params_k, queue, queue_ptr


# ----------------------------------------------------------------------------
# main
# ----------------------------------------------------------------------------
if __name__ == "__main__":
    # Small shapes consistent with the module (in_channels=feature size, K=queue):
    N, C_IN, T_STEPS = 2, 8, 16
    C_FEAT, K_QUEUE = 32, 256
    MOMENTUM, TEMP = 0.99, 0.1

    key = jax.random.PRNGKey(0)
    k_im1, k_im2, k_w, k_queue = jax.random.split(key, 4)

    im1 = jax.random.normal(k_im1, (N, C_IN, T_STEPS), jnp.float32)
    im2 = jax.random.normal(k_im2, (N, C_IN, T_STEPS), jnp.float32)

    # deterministic encoder params; encoder_k starts as a deepcopy of encoder_q
    w_q = jax.random.normal(k_w, (C_FEAT, C_IN), jnp.float32) * 0.1
    b_q = jnp.zeros((C_FEAT,), jnp.float32)
    params_q = {"w": w_q, "b": b_q}
    params_k = jax.tree.map(lambda p: p, params_q)

    # queue buffer: persistent (T, C, K) layout, unit-norm over C, stored in bf16
    queue = jax.random.normal(k_queue, (T_STEPS, C_FEAT, K_QUEUE), jnp.float32)
    queue = queue * jax.lax.rsqrt(
        jnp.maximum(jnp.sum(queue * queue, axis=1, keepdims=True), 1e-24))
    queue = queue.astype(jnp.bfloat16)
    queue_ptr = 0

    # tile_t=8 -> 2 "parallel" T blocks (encoder & loss); tile_k=128 with K=256 ->
    # 2 K steps, exercising the online-logsumexp merge path.
    (q_out, losses), params_k, queue, queue_ptr = moco_forward(
        im1, im2, params_q, params_k, queue, queue_ptr,
        m=MOMENTUM, temp=TEMP, tile_t_enc=8, tile_t_loss=8, tile_k=128)

    jax.block_until_ready((q_out, losses[0], queue))
    assert q_out.shape == (N, C_FEAT, T_STEPS)
    assert losses[0].shape == ()
    assert bool(jnp.isfinite(losses[0]))
    print("KERNEL_OK")
</pallas_src>

<mosaic_0001>
module attributes {stable_mosaic.version = 11 : i64} {
  func.func @_encoder_kernel(%arg0: i32, %arg1: memref<2x16x8xf32, #tpu.memory_space<vmem>>, %arg2: memref<8x32xf32, #tpu.memory_space<vmem>>, %arg3: memref<1x32xf32, #tpu.memory_space<vmem>>, %arg4: memref<8x32xf32, #tpu.memory_space<vmem>>, %arg5: memref<1x32xf32, #tpu.memory_space<vmem>>, %arg6: memref<8x4x32xbf16, #tpu.memory_space<vmem>>, %arg7: memref<8x4x32xbf16, #tpu.memory_space<vmem>>, %arg8: memref<8x2x32xf32, #tpu.memory_space<vmem>>, %arg9: memref<8x4x1xf32, #tpu.memory_space<vmem>>) attributes {dimension_semantics = [#tpu.dimension_semantics<parallel>], iteration_bounds = array<i64: 2>, scalar_prefetch = 0 : i64, scratch_operands = 0 : i64, tpu.core_type = #tpu.core_type<tc>, window_params = [{transform_indices = @transform_0, window_bounds = array<i64: 2, 16, 8>}, {pipeline_mode = #tpu.pipeline_mode<synchronous>, transform_indices = @transform_1, window_bounds = array<i64: 8, 32>}, {pipeline_mode = #tpu.pipeline_mode<synchronous>, transform_indices = @transform_2, window_bounds = array<i64: 1, 32>}, {pipeline_mode = #tpu.pipeline_mode<synchronous>, transform_indices = @transform_3, window_bounds = array<i64: 8, 32>}, {pipeline_mode = #tpu.pipeline_mode<synchronous>, transform_indices = @transform_4, window_bounds = array<i64: 1, 32>}, {transform_indices = @transform_5, window_bounds = array<i64: 8, 4, 32>}, {transform_indices = @transform_6, window_bounds = array<i64: 8, 4, 32>}, {transform_indices = @transform_7, window_bounds = array<i64: 8, 2, 32>}, {transform_indices = @transform_8, window_bounds = array<i64: 8, 4, 1>}]} {
    %c0 = arith.constant 0 : index
    %c0_0 = arith.constant 0 : index
    %0 = vector.load %arg2[%c0, %c0_0] : memref<8x32xf32, #tpu.memory_space<vmem>>, vector<8x32xf32>
    %c0_1 = arith.constant 0 : index
    %c0_2 = arith.constant 0 : index
    %1 = vector.load %arg3[%c0_1, %c0_2] : memref<1x32xf32, #tpu.memory_space<vmem>>, vector<1x32xf32>
    %c0_3 = arith.constant 0 : index
    %c0_4 = arith.constant 0 : index
    %2 = vector.load %arg4[%c0_3, %c0_4] : memref<8x32xf32, #tpu.memory_space<vmem>>, vector<8x32xf32>
    %c0_5 = arith.constant 0 : index
    %c0_6 = arith.constant 0 : index
    %3 = vector.load %arg5[%c0_5, %c0_6] : memref<1x32xf32, #tpu.memory_space<vmem>>, vector<1x32xf32>
    %c0_7 = arith.constant 0 : index
    %c0_8 = arith.constant 0 : index
    %c0_9 = arith.constant 0 : index
    %4 = vector.load %arg1[%c0_7, %c0_8, %c0_9] : memref<2x16x8xf32, #tpu.memory_space<vmem>>, vector<1x16x8xf32>
    %5 = vector.shape_cast %4 : vector<1x16x8xf32> to vector<16x8xf32>
    %c1 = arith.constant 1 : index
    %c0_10 = arith.constant 0 : index
    %c0_11 = arith.constant 0 : index
    %6 = vector.load %arg1[%c1, %c0_10, %c0_11] : memref<2x16x8xf32, #tpu.memory_space<vmem>>, vector<1x16x8xf32>
    %7 = vector.shape_cast %6 : vector<1x16x8xf32> to vector<16x8xf32>
    %cst = arith.constant dense<0.000000e+00> : vector<16x32xf32>
    %8 = tpu.matmul %5, %0, %cst {dimension_numbers = #tpu.dot_dimension_numbers<[1], [0], [0], [1], [0, 0, 1, 1], [], []>} : vector<16x8xf32>, vector<8x32xf32>, vector<16x32xf32> -> vector<16x32xf32>
    %9 = vector.broadcast %1 : vector<1x32xf32> to vector<16x32xf32>
    %10 = arith.addf %8, %9 : vector<16x32xf32>
    %11 = arith.mulf %10, %10 : vector<16x32xf32>
    %cst_12 = arith.constant dense<0.000000e+00> : vector<16xf32>
    %12 = vector.multi_reduction <add>, %11, %cst_12 [1] : vector<16x32xf32> to vector<16xf32>
    %13 = vector.shape_cast %12 : vector<16xf32> to vector<16x1xf32>
    %cst_13 = arith.constant 1.000000e-24 : f32
    %14 = vector.broadcast %cst_13 : f32 to vector<16x1xf32>
    %15 = arith.maximumf %13, %14 : vector<16x1xf32>
    %16 = math.rsqrt %15 : vector<16x1xf32>
    %17 = vector.broadcast %16 : vector<16x1xf32> to vector<16x32xf32>
    %18 = arith.mulf %10, %17 : vector<16x32xf32>
    %cst_14 = arith.constant dense<0.000000e+00> : vector<16x32xf32>
    %19 = tpu.matmul %7, %0, %cst_14 {dimension_numbers = #tpu.dot_dimension_numbers<[1], [0], [0], [1], [0, 0, 1, 1], [], []>} : vector<16x8xf32>, vector<8x32xf32>, vector<16x32xf32> -> vector<16x32xf32>
    %20 = vector.broadcast %1 : vector<1x32xf32> to vector<16x32xf32>
    %21 = arith.addf %19, %20 : vector<16x32xf32>
    %22 = arith.mulf %21, %21 : vector<16x32xf32>
    %cst_15 = arith.constant dense<0.000000e+00> : vector<16xf32>
    %23 = vector.multi_reduction <add>, %22, %cst_15 [1] : vector<16x32xf32> to vector<16xf32>
    %24 = vector.shape_cast %23 : vector<16xf32> to vector<16x1xf32>
    %cst_16 = arith.constant 1.000000e-24 : f32
    %25 = vector.broadcast %cst_16 : f32 to vector<16x1xf32>
    %26 = arith.maximumf %24, %25 : vector<16x1xf32>
    %27 = math.rsqrt %26 : vector<16x1xf32>
    %28 = vector.broadcast %27 : vector<16x1xf32> to vector<16x32xf32>
    %29 = arith.mulf %21, %28 : vector<16x32xf32>
    %cst_17 = arith.constant dense<0.000000e+00> : vector<16x32xf32>
    %30 = tpu.matmul %5, %2, %cst_17 {dimension_numbers = #tpu.dot_dimension_numbers<[1], [0], [0], [1], [0, 0, 1, 1], [], []>} : vector<16x8xf32>, vector<8x32xf32>, vector<16x32xf32> -> vector<16x32xf32>
    %31 = vector.broadcast %3 : vector<1x32xf32> to vector<16x32xf32>
    %32 = arith.addf %30, %31 : vector<16x32xf32>
    %33 = arith.mulf %32, %32 : vector<16x32xf32>
    %cst_18 = arith.constant dense<0.000000e+00> : vector<16xf32>
    %34 = vector.multi_reduction <add>, %33, %cst_18 [1] : vector<16x32xf32> to vector<16xf32>
    %35 = vector.shape_cast %34 : vector<16xf32> to vector<16x1xf32>
    %cst_19 = arith.constant 1.000000e-24 : f32
    %36 = vector.broadcast %cst_19 : f32 to vector<16x1xf32>
    %37 = arith.maximumf %35, %36 : vector<16x1xf32>
    %38 = math.rsqrt %37 : vector<16x1xf32>
    %39 = vector.broadcast %38 : vector<16x1xf32> to vector<16x32xf32>
    %40 = arith.mulf %32, %39 : vector<16x32xf32>
    %cst_20 = arith.constant dense<0.000000e+00> : vector<16x32xf32>
    %41 = tpu.matmul %7, %2, %cst_20 {dimension_numbers = #tpu.dot_dimension_numbers<[1], [0], [0], [1], [0, 0, 1, 1], [], []>} : vector<16x8xf32>, vector<8x32xf32>, vector<16x32xf32> -> vector<16x32xf32>
    %42 = vector.broadcast %3 : vector<1x32xf32> to vector<16x32xf32>
    %43 = arith.addf %41, %42 : vector<16x32xf32>
    %44 = arith.mulf %43, %43 : vector<16x32xf32>
    %cst_21 = arith.constant dense<0.000000e+00> : vector<16xf32>
    %45 = vector.multi_reduction <add>, %44, %cst_21 [1] : vector<16x32xf32> to vector<16xf32>
    %46 = vector.shape_cast %45 : vector<16xf32> to vector<16x1xf32>
    %cst_22 = arith.constant 1.000000e-24 : f32
    %47 = vector.broadcast %cst_22 : f32 to vector<16x1xf32>
    %48 = arith.maximumf %46, %47 : vector<16x1xf32>
    %49 = math.rsqrt %48 : vector<16x1xf32>
    %50 = vector.broadcast %49 : vector<16x1xf32> to vector<16x32xf32>
    %51 = arith.mulf %43, %50 : vector<16x32xf32>
    %52 = arith.mulf %18, %51 : vector<16x32xf32>
    %cst_23 = arith.constant dense<0.000000e+00> : vector<16xf32>
    %53 = vector.multi_reduction <add>, %52, %cst_23 [1] : vector<16x32xf32> to vector<16xf32>
    %54 = vector.shape_cast %53 : vector<16xf32> to vector<16x1xf32>
    %55 = arith.mulf %29, %40 : vector<16x32xf32>
    %cst_24 = arith.constant dense<0.000000e+00> : vector<16xf32>
    %56 = vector.multi_reduction <add>, %55, %cst_24 [1] : vector<16x32xf32> to vector<16xf32>
    %57 = vector.shape_cast %56 : vector<16xf32> to vector<16x1xf32>
    %58 = vector.shape_cast %18 : vector<16x32xf32> to vector<8x2x32xf32>
    %59 = vector.shape_cast %29 : vector<16x32xf32> to vector<8x2x32xf32>
    %60 = vector.shape_cast %40 : vector<16x32xf32> to vector<8x2x32xf32>
    %61 = vector.shape_cast %51 : vector<16x32xf32> to vector<8x2x32xf32>
    %62 = arith.truncf %58 : vector<8x2x32xf32> to vector<8x2x32xbf16>
    %c0_25 = arith.constant 0 : index
    %c0_26 = arith.constant 0 : index
    %c0_27 = arith.constant 0 : index
    %63 = vector.load %arg6[%c0_25, %c0_26, %c0_27] : memref<8x4x32xbf16, #tpu.memory_space<vmem>>, vector<8x2x32xbf16>
    tpu.vector_store %arg6[%c0_25, %c0_26, %c0_27], %62 {strides = array<i32>} : memref<8x4x32xbf16, #tpu.memory_space<vmem>>, vector<8x2x32xbf16>,
    %64 = arith.truncf %59 : vector<8x2x32xf32> to vector<8x2x32xbf16>
    %c0_28 = arith.constant 0 : index
    %c2 = arith.constant 2 : index
    %c0_29 = arith.constant 0 : index
    %65 = vector.load %arg6[%c0_28, %c2, %c0_29] : memref<8x4x32xbf16, #tpu.memory_space<vmem>>, vector<8x2x32xbf16>
    tpu.vector_store %arg6[%c0_28, %c2, %c0_29], %64 {strides = array<i32>} : memref<8x4x32xbf16, #tpu.memory_space<vmem>>, vector<8x2x32xbf16>,
    %66 = arith.truncf %60 : vector<8x2x32xf32> to vector<8x2x32xbf16>
    %c0_30 = arith.constant 0 : index
    %c0_31 = arith.constant 0 : index
    %c0_32 = arith.constant 0 : index
    %67 = vector.load %arg7[%c0_30, %c0_31, %c0_32] : memref<8x4x32xbf16, #tpu.memory_space<vmem>>, vector<8x2x32xbf16>
    tpu.vector_store %arg7[%c0_30, %c0_31, %c0_32], %66 {strides = array<i32>} : memref<8x4x32xbf16, #tpu.memory_space<vmem>>, vector<8x2x32xbf16>,
    %68 = arith.truncf %61 : vector<8x2x32xf32> to vector<8x2x32xbf16>
    %c0_33 = arith.constant 0 : index
    %c2_34 = arith.constant 2 : index
    %c0_35 = arith.constant 0 : index
    %69 = vector.load %arg7[%c0_33, %c2_34, %c0_35] : memref<8x4x32xbf16, #tpu.memory_space<vmem>>, vector<8x2x32xbf16>
    tpu.vector_store %arg7[%c0_33, %c2_34, %c0_35], %68 {strides = array<i32>} : memref<8x4x32xbf16, #tpu.memory_space<vmem>>, vector<8x2x32xbf16>,
    %c0_36 = arith.constant 0 : index
    %c0_37 = arith.constant 0 : index
    %c0_38 = arith.constant 0 : index
    %70 = vector.load %arg8[%c0_36, %c0_37, %c0_38] : memref<8x2x32xf32, #tpu.memory_space<vmem>>, vector<8x2x32xf32>
    tpu.vector_store %arg8[%c0_36, %c0_37, %c0_38], %58 {strides = array<i32>} : memref<8x2x32xf32, #tpu.memory_space<vmem>>, vector<8x2x32xf32>,
    %71 = vector.shape_cast %54 : vector<16x1xf32> to vector<8x2x1xf32>
    %c0_39 = arith.constant 0 : index
    %c0_40 = arith.constant 0 : index
    %c0_41 = arith.constant 0 : index
    %72 = vector.load %arg9[%c0_39, %c0_40, %c0_41] : memref<8x4x1xf32, #tpu.memory_space<vmem>>, vector<8x2x1xf32>
    tpu.vector_store %arg9[%c0_39, %c0_40, %c0_41], %71 {strides = array<i32>} : memref<8x4x1xf32, #tpu.memory_space<vmem>>, vector<8x2x1xf32>,
    %73 = vector.shape_cast %57 : vector<16x1xf32> to vector<8x2x1xf32>
    %c0_42 = arith.constant 0 : index
    %c2_43 = arith.constant 2 : index
    %c0_44 = arith.constant 0 : index
    %74 = vector.load %arg9[%c0_42, %c2_43, %c0_44] : memref<8x4x1xf32, #tpu.memory_space<vmem>>, vector<8x2x1xf32>
    tpu.vector_store %arg9[%c0_42, %c2_43, %c0_44], %73 {strides = array<i32>} : memref<8x4x1xf32, #tpu.memory_space<vmem>>, vector<8x2x1xf32>,
    return
  }
  func.func @transform_0(%arg0: i32) -> (i32, i32, i32) {
    %c0_i32 = arith.constant 0 : i32
    %c0_i32_0 = arith.constant 0 : i32
    %c0_i32_1 = arith.constant 0 : i32
    return %c0_i32, %arg0, %c0_i32_0 : i32, i32, i32
  }
  func.func @transform_1(%arg0: i32) -> (i32, i32) {
    %c0_i32 = arith.constant 0 : i32
    %c0_i32_0 = arith.constant 0 : i32
    %c0_i32_1 = arith.constant 0 : i32
    return %c0_i32, %c0_i32_0 : i32, i32
  }
  func.func @transform_2(%arg0: i32) -> (i32, i32) {
    %c0_i32 = arith.constant 0 : i32
    %c0_i32_0 = arith.constant 0 : i32
    %c0_i32_1 = arith.constant 0 : i32
    return %c0_i32, %c0_i32_0 : i32, i32
  }
  func.func @transform_3(%arg0: i32) -> (i32, i32) {
    %c0_i32 = arith.constant 0 : i32
    %c0_i32_0 = arith.constant 0 : i32
    %c0_i32_1 = arith.constant 0 : i32
    return %c0_i32, %c0_i32_0 : i32, i32
  }
  func.func @transform_4(%arg0: i32) -> (i32, i32) {
    %c0_i32 = arith.constant 0 : i32
    %c0_i32_0 = arith.constant 0 : i32
    %c0_i32_1 = arith.constant 0 : i32
    return %c0_i32, %c0_i32_0 : i32, i32
  }
  func.func @transform_5(%arg0: i32) -> (i32, i32, i32) {
    %c0_i32 = arith.constant 0 : i32
    %c0_i32_0 = arith.constant 0 : i32
    %c0_i32_1 = arith.constant 0 : i32
    return %arg0, %c0_i32, %c0_i32_0 : i32, i32, i32
  }
  func.func @transform_6(%arg0: i32) -> (i32, i32, i32) {
    %c0_i32 = arith.constant 0 : i32
    %c0_i32_0 = arith.constant 0 : i32
    %c0_i32_1 = arith.constant 0 : i32
    return %arg0, %c0_i32, %c0_i32_0 : i32, i32, i32
  }
  func.func @transform_7(%arg0: i32) -> (i32, i32, i32) {
    %c0_i32 = arith.constant 0 : i32
    %c0_i32_0 = arith.constant 0 : i32
    %c0_i32_1 = arith.constant 0 : i32
    return %arg0, %c0_i32, %c0_i32_0 : i32, i32, i32
  }
  func.func @transform_8(%arg0: i32) -> (i32, i32, i32) {
    %c0_i32 = arith.constant 0 : i32
    %c0_i32_0 = arith.constant 0 : i32
    %c0_i32_1 = arith.constant 0 : i32
    return %arg0, %c0_i32, %c0_i32_0 : i32, i32, i32
  }
}

</mosaic_0001>

<llo_original>
// kernel: tpu_custom_call.1
$region0: #{tpu_custom_call.1}
  #allocation0 [shape = 'u32[]', space=smem, size = 0x4, offset = 0x4, fixed_abs, tag = 'smem constant byte address 0x4 - core index']
  #allocation1 [shape = 'u32[144,128]{1,0:T(1,128)}', space=vmem, size = 0x12000, scoped, tag = 'internal scratch']
  %s0 = inlined_call_operand.vmem [shape: f32[2,32,8], index: 0, kind: input, shape index: {}]
  %s1 = inlined_call_operand.vmem [shape: f32[8,32], index: 1, kind: input, shape index: {}]
  %s2 = inlined_call_operand.vmem [shape: f32[1,32], index: 2, kind: input, shape index: {}]
  %s3 = inlined_call_operand.vmem [shape: f32[8,32], index: 3, kind: input, shape index: {}]
  %s4 = inlined_call_operand.vmem [shape: f32[1,32], index: 4, kind: input, shape index: {}]
  %s5 = inlined_call_operand.hbm [shape: bf16[16,4,32], index: 5, kind: output, shape index: {0}]
  %s6 = inlined_call_operand.hbm [shape: bf16[16,4,32], index: 6, kind: output, shape index: {1}]
  %s7 = inlined_call_operand.hbm [shape: f32[16,2,32], index: 7, kind: output, shape index: {2}]
  %s8 = inlined_call_operand.vmem [shape: f32[16,4,1], index: 8, kind: output, shape index: {3}]
  %9 = xla_tuple %s5, %s6, %s7, %s8
  %s10 = sld [smem:[#allocation0]]
  $region115: #{tpu_custom_call.1} parent=0
    _
  %s12 = ssub.s32 1, %s10
  %s13 = scalar_select 0, %s12, %s10
  $region1: #{tpu_custom_call.1} parent=0
    #allocation2 [shape = 'u8[32768]{0}', space=vmem, size = 0x8000, scoped, tag = 'input window, operand 0']
    #allocation3 [shape = 'u8[16384]{0}', space=vmem, size = 0x4000, scoped, tag = 'output window, operand 0']
    #allocation4 [shape = 's32[2]{0}', space=sflag, size = 0x8, scoped, tag = 'scoped memory for tpu_custom_call.1']
    #allocation5 [shape = 'u8[16384]{0}', space=vmem, size = 0x4000, scoped, tag = 'output window, operand 1']
    #allocation6 [shape = 's32[2]{0}', space=sflag, size = 0x8, scoped, tag = 'scoped memory for tpu_custom_call.1']
    #allocation7 [shape = 'u8[16384]{0}', space=vmem, size = 0x4000, scoped, tag = 'output window, operand 2']
    %14 = vsyncpa [#allocation4], 0
    %s15 = scalar_lea.sflag [#allocation4], 1
    %16 = vsyncpa %s15, 0
    %17 = vsyncpa [#allocation6], 0
    %s18 = scalar_lea.sflag [#allocation6], 1
    %19 = vsyncpa %s18, 0
    loop: start=0, step=1, limit=4
    $region2: #{tpu_custom_call.1} parent=1 // loop_pre_header
      _
    $region3: #{tpu_custom_call.1} parent=1 // loop_header
      %s21 = sphi 0, %s25
      %p22 = scmp.ge.s32.totalorder %s21, 4
      %s31 = sphi 0, %s33
      %s34 = sphi 0, %s31
      %s35 = sphi 0, %s34
      %s51 = sphi 0, %s35
      %s55 = sphi 0, %s55
      %s57 = sphi 0, %s55
      %s58 = sphi 0, %s57
      %s72 = sphi 0, %s58
      %s76 = sphi 0, %s76
      %s78 = sphi 0, %s76
      %s79 = sphi 0, %s78
      %s93 = sphi 0, %s79
      %s97 = sphi 0, %s97
      %s99 = sphi 0, %s97
      %s100 = sphi 0, %s99
      %s114 = sphi 0, %s100
      %s118 = sphi 0, %s118
      %s120 = sphi 0, %s118
      %s121 = sphi 0, %s120
      %s135 = sphi 0, %s121
      %s141 = sphi 0, %s143
      %s144 = sphi 0, %s141
      %s145 = sphi 0, %s144
      %s161 = sphi 0, %s145
      %s167 = sphi 0, %s169
      %s170 = sphi 0, %s167
      %s171 = sphi 0, %s170
      %s187 = sphi 0, %s171
      %s193 = sphi 0, %s195
      %s196 = sphi 0, %s193
      %s197 = sphi 0, %s196
      %s213 = sphi 0, %s197
      %s219 = sphi 0, %s221
      %s222 = sphi 0, %s219
      %s223 = sphi 0, %s222
      %s239 = sphi 0, %s223
    $region4: #{tpu_custom_call.1} parent=1 // loop_header_branch
      %24 = sbr.rel (%p22) target = $region8
    $region5: #{tpu_custom_call.1} parent=1 // loop_body
      %s26 = ssub.s32 %s21, 1
      %s27 = ssub.s32 %s21, 2
      %s28 = sadd.s32 %s21, 1
      %s29 = ssub.s32 %s21, %s28
      %p30 = scmp.eq.s32.totalorder %s29, 0
      %s32 = sadd.s32 %s31, 1
      %s33 = scalar_select %p30, %s31, %s32
      %p36 = pneg %p30
      %p37 = scmp.eq.s32.totalorder %s21, 1
      %p38 = por %p36, %p37
      %p39 = scmp.ne.s32.totalorder %s31, %s34
      %p40 = scmp.eq.s32.totalorder %s21, 0
      %p41 = por %p39, %p40
      %p42 = scmp.ne.s32.totalorder %s31, %s34
      %p43 = scmp.eq.s32.totalorder %s26, 1
      %p44 = por %p42, %p43
      %p45 = scmp.ne.s32.totalorder %s34, %s35
      %p46 = scmp.eq.s32.totalorder %s26, 0
      %p47 = por %p45, %p46
      %p48 = scmp.ne.s32.totalorder %s34, %s35
      %p49 = scmp.eq.s32.totalorder %s27, 1
      %p50 = por %p48, %p49
      %p52 = scmp.ne.s32.totalorder %s35, %s51
      %p53 = scmp.eq.s32.totalorder %s27, 0
      %p54 = por %p52, %p53
      %s56 = sadd.s32 %s55, 1
      %p59 = scmp.eq.s32.totalorder %s21, 1
      %p60 = scmp.ne.s32.totalorder %s55, %s57
      %p61 = scmp.eq.s32.totalorder %s21, 0
      %p62 = por %p60, %p61
      %p63 = scmp.ne.s32.totalorder %s55, %s57
      %p64 = scmp.eq.s32.totalorder %s26, 1
      %p65 = por %p63, %p64
      %p66 = scmp.ne.s32.totalorder %s57, %s58
      %p67 = scmp.eq.s32.totalorder %s26, 0
      %p68 = por %p66, %p67
      %p69 = scmp.ne.s32.totalorder %s57, %s58
      %p70 = scmp.eq.s32.totalorder %s27, 1
      %p71 = por %p69, %p70
      %p73 = scmp.ne.s32.totalorder %s58, %s72
      %p74 = scmp.eq.s32.totalorder %s27, 0
      %p75 = por %p73, %p74
      %s77 = sadd.s32 %s76, 1
      %p80 = scmp.eq.s32.totalorder %s21, 1
      %p81 = scmp.ne.s32.totalorder %s76, %s78
      %p82 = scmp.eq.s32.totalorder %s21, 0
      %p83 = por %p81, %p82
      %p84 = scmp.ne.s32.totalorder %s76, %s78
      %p85 = scmp.eq.s32.totalorder %s26, 1
      %p86 = por %p84, %p85
      %p87 = scmp.ne.s32.totalorder %s78, %s79
      %p88 = scmp.eq.s32.totalorder %s26, 0
      %p89 = por %p87, %p88
      %p90 = scmp.ne.s32.totalorder %s78, %s79
      %p91 = scmp.eq.s32.totalorder %s27, 1
      %p92 = por %p90, %p91
      %p94 = scmp.ne.s32.totalorder %s79, %s93
      %p95 = scmp.eq.s32.totalorder %s27, 0
      %p96 = por %p94, %p95
      %s98 = sadd.s32 %s97, 1
      %p101 = scmp.eq.s32.totalorder %s21, 1
      %p102 = scmp.ne.s32.totalorder %s97, %s99
      %p103 = scmp.eq.s32.totalorder %s21, 0
      %p104 = por %p102, %p103
      %p105 = scmp.ne.s32.totalorder %s97, %s99
      %p106 = scmp.eq.s32.totalorder %s26, 1
      %p107 = por %p105, %p106
      %p108 = scmp.ne.s32.totalorder %s99, %s100
      %p109 = scmp.eq.s32.totalorder %s26, 0
      %p110 = por %p108, %p109
      %p111 = scmp.ne.s32.totalorder %s99, %s100
      %p112 = scmp.eq.s32.totalorder %s27, 1
      %p113 = por %p111, %p112
      %p115 = scmp.ne.s32.totalorder %s100, %s114
      %p116 = scmp.eq.s32.totalorder %s27, 0
      %p117 = por %p115, %p116
      %s119 = sadd.s32 %s118, 1
      %p122 = scmp.eq.s32.totalorder %s21, 1
      %p123 = scmp.ne.s32.totalorder %s118, %s120
      %p124 = scmp.eq.s32.totalorder %s21, 0
      %p125 = por %p123, %p124
      %p126 = scmp.ne.s32.totalorder %s118, %s120
      %p127 = scmp.eq.s32.totalorder %s26, 1
      %p128 = por %p126, %p127
      %p129 = scmp.ne.s32.totalorder %s120, %s121
      %p130 = scmp.eq.s32.totalorder %s26, 0
      %p131 = por %p129, %p130
      %p132 = scmp.ne.s32.totalorder %s120, %s121
      %p133 = scmp.eq.s32.totalorder %s27, 1
      %p134 = por %p132, %p133
      %p136 = scmp.ne.s32.totalorder %s121, %s135
      %p137 = scmp.eq.s32.totalorder %s27, 0
      %p138 = por %p136, %p137
      %s139 = ssub.s32 %s21, %s28
      %p140 = scmp.eq.s32.totalorder %s139, 0
      %s142 = sadd.s32 %s141, 1
      %s143 = scalar_select %p140, %s141, %s142
      %p146 = pneg %p140
      %p147 = scmp.eq.s32.totalorder %s21, 1
      %p148 = por %p146, %p147
      %p149 = scmp.ne.s32.totalorder %s141, %s144
      %p150 = scmp.eq.s32.totalorder %s21, 0
      %p151 = por %p149, %p150
      %p152 = scmp.ne.s32.totalorder %s141, %s144
      %p153 = scmp.eq.s32.totalorder %s26, 1
      %p154 = por %p152, %p153
      %p155 = scmp.ne.s32.totalorder %s144, %s145
      %p156 = scmp.eq.s32.totalorder %s26, 0
      %p157 = por %p155, %p156
      %p158 = scmp.ne.s32.totalorder %s144, %s145
      %p159 = scmp.eq.s32.totalorder %s27, 1
      %p160 = por %p158, %p159
      %p162 = scmp.ne.s32.totalorder %s145, %s161
      %p163 = scmp.eq.s32.totalorder %s27, 0
      %p164 = por %p162, %p163
      %s165 = ssub.s32 %s21, %s28
      %p166 = scmp.eq.s32.totalorder %s165, 0
      %s168 = sadd.s32 %s167, 1
      %s169 = scalar_select %p166, %s167, %s168
      %p172 = pneg %p166
      %p173 = scmp.eq.s32.totalorder %s21, 1
      %p174 = por %p172, %p173
      %p175 = scmp.ne.s32.totalorder %s167, %s170
      %p176 = scmp.eq.s32.totalorder %s21, 0
      %p177 = por %p175, %p176
      %p178 = scmp.ne.s32.totalorder %s167, %s170
      %p179 = scmp.eq.s32.totalorder %s26, 1
      %p180 = por %p178, %p179
      %p181 = scmp.ne.s32.totalorder %s170, %s171
      %p182 = scmp.eq.s32.totalorder %s26, 0
      %p183 = por %p181, %p182
      %p184 = scmp.ne.s32.totalorder %s170, %s171
      %p185 = scmp.eq.s32.totalorder %s27, 1
      %p186 = por %p184, %p185
      %p188 = scmp.ne.s32.totalorder %s171, %s187
      %p189 = scmp.eq.s32.totalorder %s27, 0
      %p190 = por %p188, %p189
      %s191 = ssub.s32 %s21, %s28
      %p192 = scmp.eq.s32.totalorder %s191, 0
      %s194 = sadd.s32 %s193, 1
      %s195 = scalar_select %p192, %s193, %s194
      %p198 = pneg %p192
      %p199 = scmp.eq.s32.totalorder %s21, 1
      %p200 = por %p198, %p199
      %p201 = scmp.ne.s32.totalorder %s193, %s196
      %p202 = scmp.eq.s32.totalorder %s21, 0
      %p203 = por %p201, %p202
      %p204 = scmp.ne.s32.totalorder %s193, %s196
      %p205 = scmp.eq.s32.totalorder %s26, 1
      %p206 = por %p204, %p205
      %p207 = scmp.ne.s32.totalorder %s196, %s197
      %p208 = scmp.eq.s32.totalorder %s26, 0
      %p209 = por %p207, %p208
      %p210 = scmp.ne.s32.totalorder %s196, %s197
      %p211 = scmp.eq.s32.totalorder %s27, 1
      %p212 = por %p210, %p211
      %p214 = scmp.ne.s32.totalorder %s197, %s213
      %p215 = scmp.eq.s32.totalorder %s27, 0
      %p216 = por %p214, %p215
      %s217 = ssub.s32 %s21, %s28
      %p218 = scmp.eq.s32.totalorder %s217, 0
      %s220 = sadd.s32 %s219, 1
      %s221 = scalar_select %p218, %s219, %s220
      %p224 = pneg %p218
      %p225 = scmp.eq.s32.totalorder %s21, 1
      %p226 = por %p224, %p225
      %p227 = scmp.ne.s32.totalorder %s219, %s222
      %p228 = scmp.eq.s32.totalorder %s21, 0
      %p229 = por %p227, %p228
      %p230 = scmp.ne.s32.totalorder %s219, %s222
      %p231 = scmp.eq.s32.totalorder %s26, 1
      %p232 = por %p230, %p231
      %p233 = scmp.ne.s32.totalorder %s222, %s223
      %p234 = scmp.eq.s32.totalorder %s26, 0
      %p235 = por %p233, %p234
      %p236 = scmp.ne.s32.totalorder %s222, %s223
      %p237 = scmp.eq.s32.totalorder %s27, 1
      %p238 = por %p236, %p237
      %p240 = scmp.ne.s32.totalorder %s223, %s239
      %p241 = scmp.eq.s32.totalorder %s27, 0
      %p242 = por %p240, %p241
      %p243 = scmp.le.s32.totalorder 1, %s21
      %p244 = scmp.lt.s32.totalorder %s21, 3
      %p245 = pnand %p243, %p244
      %p246 = pneg %p245
      // Predicated region
      $region9: #{tpu_custom_call.1} parent=5 // pred_check
        _
      $region10: #{tpu_custom_call.1} parent=5 // pred_check_branch
        %248 = sbr.rel (%p245) target = $region12
      $region11: #{tpu_custom_call.1} parent=5 // pred_region
        %s249 = ssub.s32 %s21, 1
        // Predicated region
        $region13: #{tpu_custom_call.1} parent=11 // pred_check
          %p250 = pneg %p68
        $region14: #{tpu_custom_call.1} parent=11 // pred_check_branch
          %252 = sbr.rel (%p250) target = $region16
        $region15: #{tpu_custom_call.1} parent=11 // pred_region
          _
        $region16: #{tpu_custom_call.1} parent=11 // pred_fallthru
          _
        // Predicated region
        $region17: #{tpu_custom_call.1} parent=11 // pred_check
          %p253 = pneg %p89
        $region18: #{tpu_custom_call.1} parent=11 // pred_check_branch
          %255 = sbr.rel (%p253) target = $region20
        $region19: #{tpu_custom_call.1} parent=11 // pred_region
          _
        $region20: #{tpu_custom_call.1} parent=11 // pred_fallthru
          _
        // Predicated region
        $region21: #{tpu_custom_call.1} parent=11 // pred_check
          %p256 = pneg %p110
        $region22: #{tpu_custom_call.1} parent=11 // pred_check_branch
          %258 = sbr.rel (%p256) target = $region24
        $region23: #{tpu_custom_call.1} parent=11 // pred_region
          _
        $region24: #{tpu_custom_call.1} parent=11 // pred_fallthru
          _
        // Predicated region
        $region25: #{tpu_custom_call.1} parent=11 // pred_check
          %p259 = pneg %p131
        $region26: #{tpu_custom_call.1} parent=11 // pred_check_branch
          %261 = sbr.rel (%p259) target = $region28
        $region27: #{tpu_custom_call.1} parent=11 // pred_region
          _
        $region28: #{tpu_custom_call.1} parent=11 // pred_fallthru
          _
      $region12: #{tpu_custom_call.1} parent=5 // pred_fallthru
        _
      %p262 = scmp.lt.s32.totalorder %s21, 2
      // Predicated region
      $region29: #{tpu_custom_call.1} parent=5 // pred_check
        %p263 = pneg %p262
      $region30: #{tpu_custom_call.1} parent=5 // pred_check_branch
        %265 = sbr.rel (%p263) target = $region32
      $region31: #{tpu_custom_call.1} parent=5 // pred_region
        // Predicated region
        $region33: #{tpu_custom_call.1} parent=31 // pred_check
          %p266 = pneg %p41
        $region34: #{tpu_custom_call.1} parent=31 // pred_check_branch
          %268 = sbr.rel (%p266) target = $region36
        $region35: #{tpu_custom_call.1} parent=31 // pred_region
          %s269 = sand.u32 %s31, 1
          %s270 = sand.u32 %s31, 1
          %s271 = smul.addr %s270, 32
          %s272 = scalar_lea.vmem [#allocation2], %s271
          %s273 = smul.u32 2, %s21
          %s274 = smul.addr %s273, 8
          %s275 = scalar_lea.vmem %s0, %s274
          // Predicated region
          $region37: #{tpu_custom_call.1} parent=35 // pred_check
            _
          $region38: #{tpu_custom_call.1} parent=35 // pred_check_branch
            %277 = sbr.rel (0) target = $region40
          $region39: #{tpu_custom_call.1} parent=35 // pred_region
            // Predicated region
            $region41: #{tpu_custom_call.1} parent=39 // pred_check
              _
            $region42: #{tpu_custom_call.1} parent=39 // pred_check_branch
              %279 = sbr.rel (0) target = $region44
            $region43: #{tpu_custom_call.1} parent=39 // pred_region
              // Predicated region
              $region56: #{tpu_custom_call.1} parent=43 // pred_check
                _
              $region57: #{tpu_custom_call.1} parent=43 // pred_check_branch
                %301 = sbr.rel (0) target = $region59
              $region58: #{tpu_custom_call.1} parent=43 // pred_region
                loop: start=0, step=1, limit=1
                $region60: #{tpu_custom_call.1} parent=58 // loop_pre_header
                  _
                $region61: #{tpu_custom_call.1} parent=58 // loop_header
                  %s303 = sphi 0, %s307
                  %p304 = scmp.ge.s32.totalorder %s303, 1
                  %s308 = sphi %s275, %s275
                  %s309 = sphi %s272, %s272
                $region62: #{tpu_custom_call.1} parent=58 // loop_header_branch
                  %306 = sbr.rel (%p304) target = $region66
                $region63: #{tpu_custom_call.1} parent=58 // loop_body
                  %v310 = vld [vmem:[%s308] sm:$0xff]
                  %311 = vst [vmem:[%s309] sm:$0xff] %v310
                  %v312 = vld [vmem:[%s308 + $0x8] sm:$0xff]
                  %313 = vst [vmem:[%s309 + $0x8] sm:$0xff] %v312
                  %v314 = vld [vmem:[%s308 + $0x20] sm:$0xff]
                  %315 = vst [vmem:[%s309 + $0x10] sm:$0xff] %v314
                  %v316 = vld [vmem:[%s308 + $0x28] sm:$0xff]
                  %317 = vst [vmem:[%s309 + $0x18] sm:$0xff] %v316
                $region64: #{tpu_custom_call.1} parent=58 // loop_footer
                  %s307 = sadd.s32 1, %s303
                $region65: #{tpu_custom_call.1} parent=58 // loop_footer_branch
                  %302 = sbr.rel target = $region61
                $region66: #{tpu_custom_call.1} parent=58 // loop_exit
                  _
              $region59: #{tpu_custom_call.1} parent=43 // pred_fallthru
                _
              // Predicated region
              $region67: #{tpu_custom_call.1} parent=43 // pred_check
                _
              $region68: #{tpu_custom_call.1} parent=43 // pred_check_branch
                %319 = sbr.rel target = $region70
              $region69: #{tpu_custom_call.1} parent=43 // pred_region
                _
              $region70: #{tpu_custom_call.1} parent=43 // pred_fallthru
                _
            $region44: #{tpu_custom_call.1} parent=39 // pred_fallthru
              _
            // Predicated region
            $region45: #{tpu_custom_call.1} parent=39 // pred_check
              _
            $region46: #{tpu_custom_call.1} parent=39 // pred_check_branch
              %281 = sbr.rel target = $region48
            $region47: #{tpu_custom_call.1} parent=39 // pred_region
              %s283 = ssub.s32 256, 1
              loop: start=0, step=1, limit=1
              $region49: #{tpu_custom_call.1} parent=47 // loop_pre_header
                _
              $region50: #{tpu_custom_call.1} parent=47 // loop_header
                %s285 = sphi 0, %s289
                %p286 = scmp.ge.s32.totalorder %s285, 1
                %s290 = sphi %s275, %s275
                %s291 = sphi %s272, %s272
              $region51: #{tpu_custom_call.1} parent=47 // loop_header_branch
                %288 = sbr.rel (%p286) target = $region55
              $region52: #{tpu_custom_call.1} parent=47 // loop_body
                %v292 = vld [vmem:[%s290] sm:%s283]
                %293 = vst [vmem:[%s291] sm:%s283] %v292
                %v294 = vld [vmem:[%s290 + $0x8] sm:%s283]
                %295 = vst [vmem:[%s291 + $0x8] sm:%s283] %v294
                %v296 = vld [vmem:[%s290 + $0x20] sm:%s283]
                %297 = vst [vmem:[%s291 + $0x10] sm:%s283] %v296
                %v298 = vld [vmem:[%s290 + $0x28] sm:%s283]
                %299 = vst [vmem:[%s291 + $0x18] sm:%s283] %v298
              $region53: #{tpu_custom_call.1} parent=47 // loop_footer
                %s289 = sadd.s32 1, %s285
              $region54: #{tpu_custom_call.1} parent=47 // loop_footer_branch
                %284 = sbr.rel target = $region50
              $region55: #{tpu_custom_call.1} parent=47 // loop_exit
                _
            $region48: #{tpu_custom_call.1} parent=39 // pred_fallthru
              _
          $region40: #{tpu_custom_call.1} parent=35 // pred_fallthru
            _
          %320 = vnop
        $region36: #{tpu_custom_call.1} parent=31 // pred_fallthru
          _
      $region32: #{tpu_custom_call.1} parent=5 // pred_fallthru
        _
      %p321 = scmp.le.s32.totalorder 1, %s21
      %p322 = scmp.lt.s32.totalorder %s21, 3
      %p323 = pnand %p321, %p322
      %p324 = pneg %p323
      // Predicated region
      $region71: #{tpu_custom_call.1} parent=5 // pred_check
        _
      $region72: #{tpu_custom_call.1} parent=5 // pred_check_branch
        %326 = sbr.rel (%p323) target = $region74
      $region73: #{tpu_custom_call.1} parent=5 // pred_region
        %s327 = ssub.s32 %s21, 1
        %s328 = sand.u32 %s34, 1
        %s329 = sand.u32 %s34, 1
        %s330 = smul.addr %s329, 32
        %s331 = scalar_lea.vmem [#allocation2], %s330
        // Predicated region
        $region75: #{tpu_custom_call.1} parent=73 // pred_check
          %p332 = pneg %p47
        $region76: #{tpu_custom_call.1} parent=73 // pred_check_branch
          %334 = sbr.rel (%p332) target = $region78
        $region77: #{tpu_custom_call.1} parent=73 // pred_region
          _
        $region78: #{tpu_custom_call.1} parent=73 // pred_fallthru
          _
        %s335 = sand.u32 %s34, 1
        %s336 = sand.u32 %s34, 1
        %s337 = smul.addr %s336, 32
        %s338 = scalar_lea.vmem [#allocation2], %s337
        %p339 = pneg %p47
        %p340 = pneg %p44
        %p341 = pneg %p68
        %p342 = pneg %p65
        %p343 = pneg %p89
        %p344 = pneg %p86
        %p345 = pneg %p110
        %p346 = pneg %p107
        %p347 = pneg %p131
        %p348 = pneg %p128
        %p349 = pneg %p157
        %p350 = pneg %p154
        %s351 = sand.u32 %s144, 1
        %s352 = scalar_lea.sflag [#allocation4], %s351
        %s353 = sand.u32 %s144, 1
        %s354 = smul.addr %s353, 16
        %s355 = scalar_lea.vmem [#allocation3], %s354
        %p356 = pneg %p183
        %p357 = pneg %p180
        %s358 = sand.u32 %s26, 1
        %s359 = scalar_lea.sflag [#allocation6], %s358
        %s360 = sand.u32 %s170, 1
        %s361 = smul.addr %s360, 16
        %s362 = scalar_lea.vmem [#allocation5], %s361
        %p363 = pneg %p209
        %p364 = pneg %p206
        %s365 = sand.u32 %s26, 1
        %s366 = scalar_lea.sflag [#allocation6], %s365
        %s367 = sand.u32 %s196, 1
        %s368 = smul.addr %s367, 16
        %s369 = scalar_lea.vmem [#allocation7], %s368
        %p370 = pneg %p235
        %p371 = pneg %p232
        %s372 = smul.u32 8, %s26
        %p373 = scmp.lt.s32.totalorder %s372, 15
        %s374 = scalar_select %p373, %s372, 15
        %s375 = smul.addr %s374, 4
        %s376 = scalar_lea.vmem %s8, %s375
        %s377 = smul.u32 2, %s26
        %s378 = smul.u32 8, %s26
        %s379 = smul.u32 8, %s26
        %s380 = smul.u32 8, %s26
        %s381 = smul.u32 8, %s26
        %p382 = scmp.lt.s32.totalorder %s381, 15
        %s383 = scalar_select %p382, %s381, 15
        %s384 = smul.addr %s383, 4
        %s385 = scalar_lea.vmem %s8, %s384
        %s386 = smul.u32 8, %s26
        %v387 = vld [vmem:[%s1] sm:$0xff]
        %v388 = vld [vmem:[%s2] sm:$0x1]
        %v389 = vld [vmem:[%s3] sm:$0xff]
        %v390 = vld [vmem:[%s4] sm:$0x1]
        %v391 = vld [vmem:[%s331] sm:$0xff]
        %v392 = vld [vmem:[%s331 + $0x8] sm:$0xff]
        %s393 = scalar_lea.vmem %s331, 16 [#allocation2]
        %v394 = vld [vmem:[%s393] sm:$0xff]
        %v395 = vld [vmem:[%s393 + $0x8] sm:$0xff]
        %v397 = vlaneseq
        %v398 = vshrl.u32 %v397, 7
        %v399 = vsub.s32 0, %v398
        %v400 = vrot.slane %v388, %v399
        %vm402 = vcmask 64512
        %v404 = vsel %vm402, %v391, 0
        %v407 = vsel %vm402, %v392, 0
        %409 = vmatprep.subr.mxu0 0.0
        %410 = vmatpush1.msra.mxu0 0.0
        %411 = vmatprep.subr.mxu0 0.0
        %412 = vmatpush1.msra.mxu0 0.0
        %413 = vmatprep.subr.mxu0 0.0
        %414 = vmatpush1.msra.mxu0 0.0
        %415 = vmatprep.subr.mxu0 0.0
        %416 = vmatpush1.msra.mxu0 0.0
        %417 = vmatprep.subr.mxu0 0.0
        %418 = vmatpush1.msra.mxu0 0.0
        %419 = vmatprep.subr.mxu0 0.0
        %420 = vmatpush1.msra.mxu0 0.0
        %421 = vmatprep.subr.mxu0 0.0
        %422 = vmatpush1.msra.mxu0 0.0
        %423 = vmatprep.subr.mxu0 0.0
        %424 = vmatpush1.msra.mxu0 0.0
        %425 = vmatprep.subr.mxu0 0.0
        %426 = vmatpush1.msra.mxu0 0.0
        %427 = vmatprep.subr.mxu0 0.0
        %428 = vmatpush1.msra.mxu0 0.0
        %429 = vmatprep.subr.mxu0 0.0
        %430 = vmatpush1.msra.mxu0 0.0
        %431 = vmatprep.subr.mxu0 0.0
        %432 = vmatpush1.msra.mxu0 0.0
        %433 = vmatprep.subr.mxu0 0.0
        %434 = vmatpush1.msra.mxu0 0.0
        %435 = vmatprep.subr.mxu0 0.0
        %436 = vmatpush1.msra.mxu0 0.0
        %437 = vmatprep.subr.mxu0 0.0
        %438 = vmatpush1.msra.mxu0 0.0
        %439 = vmatprep.subr.mxu0 0.0
        %440 = vmatpush1.msra.mxu0 %v387
        %441 = vmatprep.subr.mxu0 0.0
        %442 = vmatpush2.msra.mxu0 0.0
        %443 = vmatprep.subr.mxu0 0.0
        %444 = vmatpush2.msra.mxu0 0.0
        %445 = vmatprep.subr.mxu0 0.0
        %446 = vmatpush2.msra.mxu0 0.0
        %447 = vmatprep.subr.mxu0 0.0
        %448 = vmatpush2.msra.mxu0 0.0
        %449 = vmatprep.subr.mxu0 0.0
        %450 = vmatpush2.msra.mxu0 0.0
        %451 = vmatprep.subr.mxu0 0.0
        %452 = vmatpush2.msra.mxu0 0.0
        %453 = vmatprep.subr.mxu0 0.0
        %454 = vmatpush2.msra.mxu0 0.0
        %455 = vmatprep.subr.mxu0 0.0
        %456 = vmatpush2.msra.mxu0 0.0
        %457 = vmatprep.subr.mxu0 0.0
        %458 = vmatpush2.msra.mxu0 0.0
        %459 = vmatprep.subr.mxu0 0.0
        %460 = vmatpush2.msra.mxu0 0.0
        %461 = vmatprep.subr.mxu0 0.0
        %462 = vmatpush2.msra.mxu0 0.0
        %463 = vmatprep.subr.mxu0 0.0
        %464 = vmatpush2.msra.mxu0 0.0
        %465 = vmatprep.subr.mxu0 0.0
        %466 = vmatpush2.msra.mxu0 0.0
        %467 = vmatprep.subr.mxu0 0.0
        %468 = vmatpush2.msra.mxu0 0.0
        %469 = vmatprep.subr.mxu0 0.0
        %470 = vmatpush2.msra.mxu0 0.0
        %471 = vmatprep.subr.mxu0 0.0
        %472 = vmatpush2.msra.mxu0 0.0
        %473 = vmatprep.mubr.f32.mxu0 0.0
        %474 = vmatmul.mubr.f32.gmra.mxu0 %v404
        %v475 = vpop.f32.mrf.mxu0
        %v476 = vadd.f32 %v400, %v475
        %v477 = vpop.f32.mrf.mxu0
        %478 = vmatprep.mubr.f32.mxu0 0.0
        %479 = vmatmul.mubr.f32.gmra.mxu0 %v407
        %v480 = vpop.f32.mrf.mxu0
        %v481 = vadd.f32 %v400, %v480
        %v482 = vpop.f32.mrf.mxu0
        %483 = vdwg.mxu0
        %v484 = vmul.f32 %v476, %v476
        %v485 = vmul.f32 %v481, %v481
        %vm486 = vcmask 261120
        %v487 = vsel %vm486, %v484, 0.0
        %488 = vadd.xlane.f32.xlu0 %v487
        %v489 = vpop.xlane.xlu0 %488
        %v490 = vsel %vm486, %v485, 0.0
        %491 = vadd.xlane.f32.xlu0 %v490
        %v492 = vpop.xlane.xlu0 %491
        %v493 = vmax.f32 %v489, 1e-24
        %v494 = vmax.f32 %v492, 1e-24
        %v495 = vrsqrt.pop %v493
        %v496 = vrsqrt.pop %v494
        %v497 = vmul.f32 %v476, %v495
        %v498 = vmul.f32 %v481, %v496
        %v500 = vsel %vm402, %v394, 0
        %v503 = vsel %vm402, %v395, 0
        %505 = vmatprep.subr.mxu0 0.0
        %506 = vmatpush1.msra.mxu0 0.0
        %507 = vmatprep.subr.mxu0 0.0
        %508 = vmatpush1.msra.mxu0 0.0
        %509 = vmatprep.subr.mxu0 0.0
        %510 = vmatpush1.msra.mxu0 0.0
        %511 = vmatprep.subr.mxu0 0.0
        %512 = vmatpush1.msra.mxu0 0.0
        %513 = vmatprep.subr.mxu0 0.0
        %514 = vmatpush1.msra.mxu0 0.0
        %515 = vmatprep.subr.mxu0 0.0
        %516 = vmatpush1.msra.mxu0 0.0
        %517 = vmatprep.subr.mxu0 0.0
        %518 = vmatpush1.msra.mxu0 0.0
        %519 = vmatprep.subr.mxu0 0.0
        %520 = vmatpush1.msra.mxu0 0.0
        %521 = vmatprep.subr.mxu0 0.0
        %522 = vmatpush1.msra.mxu0 0.0
        %523 = vmatprep.subr.mxu0 0.0
        %524 = vmatpush1.msra.mxu0 0.0
        %525 = vmatprep.subr.mxu0 0.0
        %526 = vmatpush1.msra.mxu0 0.0
        %527 = vmatprep.subr.mxu0 0.0
        %528 = vmatpush1.msra.mxu0 0.0
        %529 = vmatprep.subr.mxu0 0.0
        %530 = vmatpush1.msra.mxu0 0.0
        %531 = vmatprep.subr.mxu0 0.0
        %532 = vmatpush1.msra.mxu0 0.0
        %533 = vmatprep.subr.mxu0 0.0
        %534 = vmatpush1.msra.mxu0 0.0
        %535 = vmatprep.subr.mxu0 0.0
        %536 = vmatpush1.msra.mxu0 %v387
        %537 = vmatprep.subr.mxu0 0.0
        %538 = vmatpush2.msra.mxu0 0.0
        %539 = vmatprep.subr.mxu0 0.0
        %540 = vmatpush2.msra.mxu0 0.0
        %541 = vmatprep.subr.mxu0 0.0
        %542 = vmatpush2.msra.mxu0 0.0
        %543 = vmatprep.subr.mxu0 0.0
        %544 = vmatpush2.msra.mxu0 0.0
        %545 = vmatprep.subr.mxu0 0.0
        %546 = vmatpush2.msra.mxu0 0.0
        %547 = vmatprep.subr.mxu0 0.0
        %548 = vmatpush2.msra.mxu0 0.0
        %549 = vmatprep.subr.mxu0 0.0
        %550 = vmatpush2.msra.mxu0 0.0
        %551 = vmatprep.subr.mxu0 0.0
        %552 = vmatpush2.msra.mxu0 0.0
        %553 = vmatprep.subr.mxu0 0.0
        %554 = vmatpush2.msra.mxu0 0.0
        %555 = vmatprep.subr.mxu0 0.0
        %556 = vmatpush2.msra.mxu0 0.0
        %557 = vmatprep.subr.mxu0 0.0
        %558 = vmatpush2.msra.mxu0 0.0
        %559 = vmatprep.subr.mxu0 0.0
        %560 = vmatpush2.msra.mxu0 0.0
        %561 = vmatprep.subr.mxu0 0.0
        %562 = vmatpush2.msra.mxu0 0.0
        %563 = vmatprep.subr.mxu0 0.0
        %564 = vmatpush2.msra.mxu0 0.0
        %565 = vmatprep.subr.mxu0 0.0
        %566 = vmatpush2.msra.mxu0 0.0
        %567 = vmatprep.subr.mxu0 0.0
        %568 = vmatpush2.msra.mxu0 0.0
        %569 = vmatprep.mubr.f32.mxu0 0.0
        %570 = vmatmul.mubr.f32.gmra.mxu0 %v500
        %v571 = vpop.f32.mrf.mxu0
        %v572 = vadd.f32 %v400, %v571
        %v573 = vpop.f32.mrf.mxu0
        %574 = vmatprep.mubr.f32.mxu0 0.0
        %575 = vmatmul.mubr.f32.gmra.mxu0 %v503
        %v576 = vpop.f32.mrf.mxu0
        %v577 = vadd.f32 %v400, %v576
        %v578 = vpop.f32.mrf.mxu0
        %579 = vdwg.mxu0
        %v580 = vmul.f32 %v572, %v572
        %v581 = vmul.f32 %v577, %v577
        %v582 = vsel %vm486, %v580, 0.0
        %583 = vadd.xlane.f32.xlu0 %v582
        %v584 = vpop.xlane.xlu0 %583
        %v585 = vsel %vm486, %v581, 0.0
        %586 = vadd.xlane.f32.xlu0 %v585
        %v587 = vpop.xlane.xlu0 %586
        %v588 = vmax.f32 %v584, 1e-24
        %v589 = vmax.f32 %v587, 1e-24
        %v590 = vrsqrt.pop %v588
        %v591 = vrsqrt.pop %v589
        %v592 = vmul.f32 %v572, %v590
        %v593 = vmul.f32 %v577, %v591
        %v595 = vlaneseq
        %v596 = vshrl.u32 %v595, 7
        %v597 = vsub.s32 0, %v596
        %v598 = vrot.slane %v390, %v597
        %600 = vmatprep.subr.mxu0 0.0
        %601 = vmatpush1.msra.mxu0 0.0
        %602 = vmatprep.subr.mxu0 0.0
        %603 = vmatpush1.msra.mxu0 0.0
        %604 = vmatprep.subr.mxu0 0.0
        %605 = vmatpush1.msra.mxu0 0.0
        %606 = vmatprep.subr.mxu0 0.0
        %607 = vmatpush1.msra.mxu0 0.0
        %608 = vmatprep.subr.mxu0 0.0
        %609 = vmatpush1.msra.mxu0 0.0
        %610 = vmatprep.subr.mxu0 0.0
        %611 = vmatpush1.msra.mxu0 0.0
        %612 = vmatprep.subr.mxu0 0.0
        %613 = vmatpush1.msra.mxu0 0.0
        %614 = vmatprep.subr.mxu0 0.0
        %615 = vmatpush1.msra.mxu0 0.0
        %616 = vmatprep.subr.mxu0 0.0
        %617 = vmatpush1.msra.mxu0 0.0
        %618 = vmatprep.subr.mxu0 0.0
        %619 = vmatpush1.msra.mxu0 0.0
        %620 = vmatprep.subr.mxu0 0.0
        %621 = vmatpush1.msra.mxu0 0.0
        %622 = vmatprep.subr.mxu0 0.0
        %623 = vmatpush1.msra.mxu0 0.0
        %624 = vmatprep.subr.mxu0 0.0
        %625 = vmatpush1.msra.mxu0 0.0
        %626 = vmatprep.subr.mxu0 0.0
        %627 = vmatpush1.msra.mxu0 0.0
        %628 = vmatprep.subr.mxu0 0.0
        %629 = vmatpush1.msra.mxu0 0.0
        %630 = vmatprep.subr.mxu0 0.0
        %631 = vmatpush1.msra.mxu0 %v389
        %632 = vmatprep.subr.mxu0 0.0
        %633 = vmatpush2.msra.mxu0 0.0
        %634 = vmatprep.subr.mxu0 0.0
        %635 = vmatpush2.msra.mxu0 0.0
        %636 = vmatprep.subr.mxu0 0.0
        %637 = vmatpush2.msra.mxu0 0.0
        %638 = vmatprep.subr.mxu0 0.0
        %639 = vmatpush2.msra.mxu0 0.0
        %640 = vmatprep.subr.mxu0 0.0
        %641 = vmatpush2.msra.mxu0 0.0
        %642 = vmatprep.subr.mxu0 0.0
        %643 = vmatpush2.msra.mxu0 0.0
        %644 = vmatprep.subr.mxu0 0.0
        %645 = vmatpush2.msra.mxu0 0.0
        %646 = vmatprep.subr.mxu0 0.0
        %647 = vmatpush2.msra.mxu0 0.0
        %648 = vmatprep.subr.mxu0 0.0
        %649 = vmatpush2.msra.mxu0 0.0
        %650 = vmatprep.subr.mxu0 0.0
        %651 = vmatpush2.msra.mxu0 0.0
        %652 = vmatprep.subr.mxu0 0.0
        %653 = vmatpush2.msra.mxu0 0.0
        %654 = vmatprep.subr.mxu0 0.0
        %655 = vmatpush2.msra.mxu0 0.0
        %656 = vmatprep.subr.mxu0 0.0
        %657 = vmatpush2.msra.mxu0 0.0
        %658 = vmatprep.subr.mxu0 0.0
        %659 = vmatpush2.msra.mxu0 0.0
        %660 = vmatprep.subr.mxu0 0.0
        %661 = vmatpush2.msra.mxu0 0.0
        %662 = vmatprep.subr.mxu0 0.0
        %663 = vmatpush2.msra.mxu0 0.0
        %664 = vmatprep.mubr.f32.mxu0 0.0
        %665 = vmatmul.mubr.f32.gmra.mxu0 %v404
        %v666 = vpop.f32.mrf.mxu0
        %v667 = vadd.f32 %v598, %v666
        %v668 = vpop.f32.mrf.mxu0
        %669 = vmatprep.mubr.f32.mxu0 0.0
        %670 = vmatmul.mubr.f32.gmra.mxu0 %v407
        %v671 = vpop.f32.mrf.mxu0
        %v672 = vadd.f32 %v598, %v671
        %v673 = vpop.f32.mrf.mxu0
        %674 = vdwg.mxu0
        %v675 = vmul.f32 %v667, %v667
        %v676 = vmul.f32 %v672, %v672
        %v677 = vsel %vm486, %v675, 0.0
        %678 = vadd.xlane.f32.xlu0 %v677
        %v679 = vpop.xlane.xlu0 %678
        %v680 = vsel %vm486, %v676, 0.0
        %681 = vadd.xlane.f32.xlu0 %v680
        %v682 = vpop.xlane.xlu0 %681
        %v683 = vmax.f32 %v679, 1e-24
        %v684 = vmax.f32 %v682, 1e-24
        %v685 = vrsqrt.pop %v683
        %v686 = vrsqrt.pop %v684
        %v687 = vmul.f32 %v667, %v685
        %v688 = vmul.f32 %v672, %v686
        %689 = vmatprep.subr.mxu0 0.0
        %690 = vmatpush1.msra.mxu0 0.0
        %691 = vmatprep.subr.mxu0 0.0
        %692 = vmatpush1.msra.mxu0 0.0
        %693 = vmatprep.subr.mxu0 0.0
        %694 = vmatpush1.msra.mxu0 0.0
        %695 = vmatprep.subr.mxu0 0.0
        %696 = vmatpush1.msra.mxu0 0.0
        %697 = vmatprep.subr.mxu0 0.0
        %698 = vmatpush1.msra.mxu0 0.0
        %699 = vmatprep.subr.mxu0 0.0
        %700 = vmatpush1.msra.mxu0 0.0
        %701 = vmatprep.subr.mxu0 0.0
        %702 = vmatpush1.msra.mxu0 0.0
        %703 = vmatprep.subr.mxu0 0.0
        %704 = vmatpush1.msra.mxu0 0.0
        %705 = vmatprep.subr.mxu0 0.0
        %706 = vmatpush1.msra.mxu0 0.0
        %707 = vmatprep.subr.mxu0 0.0
        %708 = vmatpush1.msra.mxu0 0.0
        %709 = vmatprep.subr.mxu0 0.0
        %710 = vmatpush1.msra.mxu0 0.0
        %711 = vmatprep.subr.mxu0 0.0
        %712 = vmatpush1.msra.mxu0 0.0
        %713 = vmatprep.subr.mxu0 0.0
        %714 = vmatpush1.msra.mxu0 0.0
        %715 = vmatprep.subr.mxu0 0.0
        %716 = vmatpush1.msra.mxu0 0.0
        %717 = vmatprep.subr.mxu0 0.0
        %718 = vmatpush1.msra.mxu0 0.0
        %719 = vmatprep.subr.mxu0 0.0
        %720 = vmatpush1.msra.mxu0 %v389
        %721 = vmatprep.subr.mxu0 0.0
        %722 = vmatpush2.msra.mxu0 0.0
        %723 = vmatprep.subr.mxu0 0.0
        %724 = vmatpush2.msra.mxu0 0.0
        %725 = vmatprep.subr.mxu0 0.0
        %726 = vmatpush2.msra.mxu0 0.0
        %727 = vmatprep.subr.mxu0 0.0
        %728 = vmatpush2.msra.mxu0 0.0
        %729 = vmatprep.subr.mxu0 0.0
        %730 = vmatpush2.msra.mxu0 0.0
        %731 = vmatprep.subr.mxu0 0.0
        %732 = vmatpush2.msra.mxu0 0.0
        %733 = vmatprep.subr.mxu0 0.0
        %734 = vmatpush2.msra.mxu0 0.0
        %735 = vmatprep.subr.mxu0 0.0
        %736 = vmatpush2.msra.mxu0 0.0
        %737 = vmatprep.subr.mxu0 0.0
        %738 = vmatpush2.msra.mxu0 0.0
        %739 = vmatprep.subr.mxu0 0.0
        %740 = vmatpush2.msra.mxu0 0.0
        %741 = vmatprep.subr.mxu0 0.0
        %742 = vmatpush2.msra.mxu0 0.0
        %743 = vmatprep.subr.mxu0 0.0
        %744 = vmatpush2.msra.mxu0 0.0
        %745 = vmatprep.subr.mxu0 0.0
        %746 = vmatpush2.msra.mxu0 0.0
        %747 = vmatprep.subr.mxu0 0.0
        %748 = vmatpush2.msra.mxu0 0.0
        %749 = vmatprep.subr.mxu0 0.0
        %750 = vmatpush2.msra.mxu0 0.0
        %751 = vmatprep.subr.mxu0 0.0
        %752 = vmatpush2.msra.mxu0 0.0
        %753 = vmatprep.mubr.f32.mxu0 0.0
        %754 = vmatmul.mubr.f32.gmra.mxu0 %v500
        %v755 = vpop.f32.mrf.mxu0
        %v756 = vadd.f32 %v598, %v755
        %v757 = vpop.f32.mrf.mxu0
        %758 = vmatprep.mubr.f32.mxu0 0.0
        %759 = vmatmul.mubr.f32.gmra.mxu0 %v503
        %v760 = vpop.f32.mrf.mxu0
        %v761 = vadd.f32 %v598, %v760
        %v762 = vpop.f32.mrf.mxu0
        %763 = vdwg.mxu0
        %v764 = vmul.f32 %v756, %v756
        %v765 = vmul.f32 %v761, %v761
        %v766 = vsel %vm486, %v764, 0.0
        %767 = vadd.xlane.f32.xlu0 %v766
        %v768 = vpop.xlane.xlu0 %767
        %v769 = vsel %vm486, %v765, 0.0
        %770 = vadd.xlane.f32.xlu0 %v769
        %v771 = vpop.xlane.xlu0 %770
        %v772 = vmax.f32 %v768, 1e-24
        %v773 = vmax.f32 %v771, 1e-24
        %v774 = vrsqrt.pop %v772
        %v775 = vrsqrt.pop %v773
        %v776 = vmul.f32 %v756, %v774
        %v777 = vmul.f32 %v761, %v775
        %v778 = vmul.f32 %v497, %v776
        %v779 = vmul.f32 %v498, %v777
        %v780 = vsel %vm486, %v778, 0.0
        %781 = vadd.xlane.f32.xlu0 %v780
        %v782 = vpop.xlane.xlu0 %781
        %v783 = vsel %vm486, %v779, 0.0
        %784 = vadd.xlane.f32.xlu0 %v783
        %v785 = vpop.xlane.xlu0 %784
        %v786 = vmul.f32 %v592, %v687
        %v787 = vmul.f32 %v593, %v688
        %v788 = vsel %vm486, %v786, 0.0
        %789 = vadd.xlane.f32.xlu0 %v788
        %v790 = vpop.xlane.xlu0 %789
        %v791 = vsel %vm486, %v787, 0.0
        %792 = vadd.xlane.f32.xlu0 %v791
        %v793 = vpop.xlane.xlu0 %792
        %v796 = vcombine.high %v497, %v497
        %v798 = vunpack.c.l.s4 1983009808
        %v799 = vunpack.c.0.s8 %v798
        %v800 = vlaneseq
        %v801 = vshrl.u32 %v800, 7
        %v802 = vsub.s32 %v799, %v801
        %v803 = vrot.slane %v497, %v802
        %v805 = vunpack.c.l.s4 1983009808
        %v806 = vunpack.c.0.s8 %v805
        %v807 = vlaneseq
        %v808 = vshrl.u32 %v807, 7
        %v809 = vsub.s32 %v806, %v808
        %v810 = vrot.slane %v796, %v809
        %v811 = vcombine.high %v803, %v803
        %v812 = vcombine.high %v810, %v810
        %v813 = vcombine.high %v498, %v498
        %v815 = vunpack.c.l.s4 1983009808
        %v816 = vunpack.c.0.s8 %v815
        %v817 = vlaneseq
        %v818 = vshrl.u32 %v817, 7
        %v819 = vsub.s32 %v816, %v818
        %v820 = vrot.slane %v498, %v819
        %v822 = vunpack.c.l.s4 1983009808
        %v823 = vunpack.c.0.s8 %v822
        %v824 = vlaneseq
        %v825 = vshrl.u32 %v824, 7
        %v826 = vsub.s32 %v823, %v825
        %v827 = vrot.slane %v813, %v826
        %v828 = vcombine.high %v820, %v820
        %v829 = vcombine.high %v827, %v827
        %v840 = vcombine.high %v592, %v592
        %v842 = vunpack.c.l.s4 1983009808
        %v843 = vunpack.c.0.s8 %v842
        %v844 = vlaneseq
        %v845 = vshrl.u32 %v844, 7
        %v846 = vsub.s32 %v843, %v845
        %v847 = vrot.slane %v592, %v846
        %v849 = vunpack.c.l.s4 1983009808
        %v850 = vunpack.c.0.s8 %v849
        %v851 = vlaneseq
        %v852 = vshrl.u32 %v851, 7
        %v853 = vsub.s32 %v850, %v852
        %v854 = vrot.slane %v840, %v853
        %v855 = vcombine.high %v847, %v847
        %v856 = vcombine.high %v854, %v854
        %v857 = vcombine.high %v593, %v593
        %v859 = vunpack.c.l.s4 1983009808
        %v860 = vunpack.c.0.s8 %v859
        %v861 = vlaneseq
        %v862 = vshrl.u32 %v861, 7
        %v863 = vsub.s32 %v860, %v862
        %v864 = vrot.slane %v593, %v863
        %v866 = vunpack.c.l.s4 1983009808
        %v867 = vunpack.c.0.s8 %v866
        %v868 = vlaneseq
        %v869 = vshrl.u32 %v868, 7
        %v870 = vsub.s32 %v867, %v869
        %v871 = vrot.slane %v857, %v870
        %v872 = vcombine.high %v864, %v864
        %v873 = vcombine.high %v871, %v871
        %v884 = vcombine.high %v687, %v687
        %v886 = vunpack.c.l.s4 1983009808
        %v887 = vunpack.c.0.s8 %v886
        %v888 = vlaneseq
        %v889 = vshrl.u32 %v888, 7
        %v890 = vsub.s32 %v887, %v889
        %v891 = vrot.slane %v687, %v890
        %v893 = vunpack.c.l.s4 1983009808
        %v894 = vunpack.c.0.s8 %v893
        %v895 = vlaneseq
        %v896 = vshrl.u32 %v895, 7
        %v897 = vsub.s32 %v894, %v896
        %v898 = vrot.slane %v884, %v897
        %v899 = vcombine.high %v891, %v891
        %v900 = vcombine.high %v898, %v898
        %v901 = vcombine.high %v688, %v688
        %v903 = vunpack.c.l.s4 1983009808
        %v904 = vunpack.c.0.s8 %v903
        %v905 = vlaneseq
        %v906 = vshrl.u32 %v905, 7
        %v907 = vsub.s32 %v904, %v906
        %v908 = vrot.slane %v688, %v907
        %v910 = vunpack.c.l.s4 1983009808
        %v911 = vunpack.c.0.s8 %v910
        %v912 = vlaneseq
        %v913 = vshrl.u32 %v912, 7
        %v914 = vsub.s32 %v911, %v913
        %v915 = vrot.slane %v901, %v914
        %v916 = vcombine.high %v908, %v908
        %v917 = vcombine.high %v915, %v915
        %v928 = vcombine.high %v776, %v776
        %v930 = vunpack.c.l.s4 1983009808
        %v931 = vunpack.c.0.s8 %v930
        %v932 = vlaneseq
        %v933 = vshrl.u32 %v932, 7
        %v934 = vsub.s32 %v931, %v933
        %v935 = vrot.slane %v776, %v934
        %v937 = vunpack.c.l.s4 1983009808
        %v938 = vunpack.c.0.s8 %v937
        %v939 = vlaneseq
        %v940 = vshrl.u32 %v939, 7
        %v941 = vsub.s32 %v938, %v940
        %v942 = vrot.slane %v928, %v941
        %v943 = vcombine.high %v935, %v935
        %v944 = vcombine.high %v942, %v942
        %v945 = vcombine.high %v777, %v777
        %v947 = vunpack.c.l.s4 1983009808
        %v948 = vunpack.c.0.s8 %v947
        %v949 = vlaneseq
        %v950 = vshrl.u32 %v949, 7
        %v951 = vsub.s32 %v948, %v950
        %v952 = vrot.slane %v777, %v951
        %v954 = vunpack.c.l.s4 1983009808
        %v955 = vunpack.c.0.s8 %v954
        %v956 = vlaneseq
        %v957 = vshrl.u32 %v956, 7
        %v958 = vsub.s32 %v955, %v957
        %v959 = vrot.slane %v945, %v958
        %v960 = vcombine.high %v952, %v952
        %v961 = vcombine.high %v959, %v959
        %v970 = vpack.c.bf16 %v803, %v803
        %v971 = vpack.c.bf16 %v811, %v811
        %v972 = vpack.c.bf16 %v810, %v810
        %v973 = vpack.c.bf16 %v812, %v812
        %v974 = vpack.c.bf16 %v820, %v820
        %v975 = vpack.c.bf16 %v828, %v828
        %v976 = vpack.c.bf16 %v827, %v827
        %v977 = vpack.c.bf16 %v829, %v829
        %vm978 = vcmask 253952
        %979 = vst.msk [vmem:[%s355] sm:$0x1] %vm978, %v970
        %980 = vst.msk [vmem:[%s355 + $0x2] sm:$0x1] %vm978, %v971
        %981 = vst.msk [vmem:[%s355 + $0x4] sm:$0x1] %vm978, %v972
        %982 = vst.msk [vmem:[%s355 + $0x6] sm:$0x1] %vm978, %v973
        %983 = vst.msk [vmem:[%s355 + $0x8] sm:$0x1] %vm978, %v974
        %984 = vst.msk [vmem:[%s355 + $0xa] sm:$0x1] %vm978, %v975
        %985 = vst.msk [vmem:[%s355 + $0xc] sm:$0x1] %vm978, %v976
        %986 = vst.msk [vmem:[%s355 + $0xe] sm:$0x1] %vm978, %v977
        %v987 = vpack.c.bf16 %v847, %v847
        %v988 = vpack.c.bf16 %v855, %v855
        %v989 = vpack.c.bf16 %v854, %v854
        %v990 = vpack.c.bf16 %v856, %v856
        %v991 = vpack.c.bf16 %v864, %v864
        %v992 = vpack.c.bf16 %v872, %v872
        %v993 = vpack.c.bf16 %v871, %v871
        %v994 = vpack.c.bf16 %v873, %v873
        %v1004 = vunpack.c.l.s4 1983009808
        %v1005 = vunpack.c.0.s8 %v1004
        %v1006 = vlaneseq
        %v1007 = vshrl.u32 %v1006, 7
        %v1008 = vsub.s32 %v1005, %v1007
        %v1009 = vrot.slane %v987, %v1008
        %v1011 = vunpack.c.l.s4 1983009808
        %v1012 = vunpack.c.0.s8 %v1011
        %v1013 = vlaneseq
        %v1014 = vshrl.u32 %v1013, 7
        %v1015 = vsub.s32 %v1012, %v1014
        %v1016 = vrot.slane %v988, %v1015
        %v1018 = vunpack.c.l.s4 1983009808
        %v1019 = vunpack.c.0.s8 %v1018
        %v1020 = vlaneseq
        %v1021 = vshrl.u32 %v1020, 7
        %v1022 = vsub.s32 %v1019, %v1021
        %v1023 = vrot.slane %v989, %v1022
        %v1025 = vunpack.c.l.s4 1983009808
        %v1026 = vunpack.c.0.s8 %v1025
        %v1027 = vlaneseq
        %v1028 = vshrl.u32 %v1027, 7
        %v1029 = vsub.s32 %v1026, %v1028
        %v1030 = vrot.slane %v990, %v1029
        %v1032 = vunpack.c.l.s4 1983009808
        %v1033 = vunpack.c.0.s8 %v1032
        %v1034 = vlaneseq
        %v1035 = vshrl.u32 %v1034, 7
        %v1036 = vsub.s32 %v1033, %v1035
        %v1037 = vrot.slane %v991, %v1036
        %v1039 = vunpack.c.l.s4 1983009808
        %v1040 = vunpack.c.0.s8 %v1039
        %v1041 = vlaneseq
        %v1042 = vshrl.u32 %v1041, 7
        %v1043 = vsub.s32 %v1040, %v1042
        %v1044 = vrot.slane %v992, %v1043
        %v1046 = vunpack.c.l.s4 1983009808
        %v1047 = vunpack.c.0.s8 %v1046
        %v1048 = vlaneseq
        %v1049 = vshrl.u32 %v1048, 7
        %v1050 = vsub.s32 %v1047, %v1049
        %v1051 = vrot.slane %v993, %v1050
        %v1053 = vunpack.c.l.s4 1983009808
        %v1054 = vunpack.c.0.s8 %v1053
        %v1055 = vlaneseq
        %v1056 = vshrl.u32 %v1055, 7
        %v1057 = vsub.s32 %v1054, %v1056
        %v1058 = vrot.slane %v994, %v1057
        %v1059 = vrot.slane %v1009, 7
        %v1060 = vrot.slane %v1016, 7
        %v1061 = vrot.slane %v1023, 7
        %v1062 = vrot.slane %v1030, 7
        %v1063 = vrot.slane %v1037, 7
        %v1064 = vrot.slane %v1044, 7
        %v1065 = vrot.slane %v1051, 7
        %v1066 = vrot.slane %v1058, 7
        %vm1075 = vcmask 254977
        %1076 = vst.msk [vmem:[%s355] sm:$0x2] %vm1075, %v1059
        %1077 = vst.msk [vmem:[%s355 + $0x2] sm:$0x2] %vm1075, %v1060
        %1078 = vst.msk [vmem:[%s355 + $0x4] sm:$0x2] %vm1075, %v1061
        %1079 = vst.msk [vmem:[%s355 + $0x6] sm:$0x2] %vm1075, %v1062
        %1080 = vst.msk [vmem:[%s355 + $0x8] sm:$0x2] %vm1075, %v1063
        %1081 = vst.msk [vmem:[%s355 + $0xa] sm:$0x2] %vm1075, %v1064
        %1082 = vst.msk [vmem:[%s355 + $0xc] sm:$0x2] %vm1075, %v1065
        %1083 = vst.msk [vmem:[%s355 + $0xe] sm:$0x2] %vm1075, %v1066
        %v1084 = vpack.c.bf16 %v891, %v891
        %v1085 = vpack.c.bf16 %v899, %v899
        %v1086 = vpack.c.bf16 %v898, %v898
        %v1087 = vpack.c.bf16 %v900, %v900
        %v1088 = vpack.c.bf16 %v908, %v908
        %v1089 = vpack.c.bf16 %v916, %v916
        %v1090 = vpack.c.bf16 %v915, %v915
        %v1091 = vpack.c.bf16 %v917, %v917
        %1092 = vst.msk [vmem:[%s362] sm:$0x1] %vm978, %v1084
        %1093 = vst.msk [vmem:[%s362 + $0x2] sm:$0x1] %vm978, %v1085
        %1094 = vst.msk [vmem:[%s362 + $0x4] sm:$0x1] %vm978, %v1086
        %1095 = vst.msk [vmem:[%s362 + $0x6] sm:$0x1] %vm978, %v1087
        %1096 = vst.msk [vmem:[%s362 + $0x8] sm:$0x1] %vm978, %v1088
        %1097 = vst.msk [vmem:[%s362 + $0xa] sm:$0x1] %vm978, %v1089
        %1098 = vst.msk [vmem:[%s362 + $0xc] sm:$0x1] %vm978, %v1090
        %1099 = vst.msk [vmem:[%s362 + $0xe] sm:$0x1] %vm978, %v1091
        %v1100 = vpack.c.bf16 %v935, %v935
        %v1101 = vpack.c.bf16 %v943, %v943
        %v1102 = vpack.c.bf16 %v942, %v942
        %v1103 = vpack.c.bf16 %v944, %v944
        %v1104 = vpack.c.bf16 %v952, %v952
        %v1105 = vpack.c.bf16 %v960, %v960
        %v1106 = vpack.c.bf16 %v959, %v959
        %v1107 = vpack.c.bf16 %v961, %v961
        %v1117 = vunpack.c.l.s4 1983009808
        %v1118 = vunpack.c.0.s8 %v1117
        %v1119 = vlaneseq
        %v1120 = vshrl.u32 %v1119, 7
        %v1121 = vsub.s32 %v1118, %v1120
        %v1122 = vrot.slane %v1100, %v1121
        %v1124 = vunpack.c.l.s4 1983009808
        %v1125 = vunpack.c.0.s8 %v1124
        %v1126 = vlaneseq
        %v1127 = vshrl.u32 %v1126, 7
        %v1128 = vsub.s32 %v1125, %v1127
        %v1129 = vrot.slane %v1101, %v1128
        %v1131 = vunpack.c.l.s4 1983009808
        %v1132 = vunpack.c.0.s8 %v1131
        %v1133 = vlaneseq
        %v1134 = vshrl.u32 %v1133, 7
        %v1135 = vsub.s32 %v1132, %v1134
        %v1136 = vrot.slane %v1102, %v1135
        %v1138 = vunpack.c.l.s4 1983009808
        %v1139 = vunpack.c.0.s8 %v1138
        %v1140 = vlaneseq
        %v1141 = vshrl.u32 %v1140, 7
        %v1142 = vsub.s32 %v1139, %v1141
        %v1143 = vrot.slane %v1103, %v1142
        %v1145 = vunpack.c.l.s4 1983009808
        %v1146 = vunpack.c.0.s8 %v1145
        %v1147 = vlaneseq
        %v1148 = vshrl.u32 %v1147, 7
        %v1149 = vsub.s32 %v1146, %v1148
        %v1150 = vrot.slane %v1104, %v1149
        %v1152 = vunpack.c.l.s4 1983009808
        %v1153 = vunpack.c.0.s8 %v1152
        %v1154 = vlaneseq
        %v1155 = vshrl.u32 %v1154, 7
        %v1156 = vsub.s32 %v1153, %v1155
        %v1157 = vrot.slane %v1105, %v1156
        %v1159 = vunpack.c.l.s4 1983009808
        %v1160 = vunpack.c.0.s8 %v1159
        %v1161 = vlaneseq
        %v1162 = vshrl.u32 %v1161, 7
        %v1163 = vsub.s32 %v1160, %v1162
        %v1164 = vrot.slane %v1106, %v1163
        %v1166 = vunpack.c.l.s4 1983009808
        %v1167 = vunpack.c.0.s8 %v1166
        %v1168 = vlaneseq
        %v1169 = vshrl.u32 %v1168, 7
        %v1170 = vsub.s32 %v1167, %v1169
        %v1171 = vrot.slane %v1107, %v1170
        %v1172 = vrot.slane %v1122, 7
        %v1173 = vrot.slane %v1129, 7
        %v1174 = vrot.slane %v1136, 7
        %v1175 = vrot.slane %v1143, 7
        %v1176 = vrot.slane %v1150, 7
        %v1177 = vrot.slane %v1157, 7
        %v1178 = vrot.slane %v1164, 7
        %v1179 = vrot.slane %v1171, 7
        %1188 = vst.msk [vmem:[%s362] sm:$0x2] %vm1075, %v1172
        %1189 = vst.msk [vmem:[%s362 + $0x2] sm:$0x2] %vm1075, %v1173
        %1190 = vst.msk [vmem:[%s362 + $0x4] sm:$0x2] %vm1075, %v1174
        %1191 = vst.msk [vmem:[%s362 + $0x6] sm:$0x2] %vm1075, %v1175
        %1192 = vst.msk [vmem:[%s362 + $0x8] sm:$0x2] %vm1075, %v1176
        %1193 = vst.msk [vmem:[%s362 + $0xa] sm:$0x2] %vm1075, %v1177
        %1194 = vst.msk [vmem:[%s362 + $0xc] sm:$0x2] %vm1075, %v1178
        %1195 = vst.msk [vmem:[%s362 + $0xe] sm:$0x2] %vm1075, %v1179
        %vm1196 = vcmask 254976
        %1197 = vst.msk [vmem:[%s369] sm:$0x3] %vm1196, %v803
        %1198 = vst.msk [vmem:[%s369 + $0x2] sm:$0x3] %vm1196, %v811
        %1199 = vst.msk [vmem:[%s369 + $0x4] sm:$0x3] %vm1196, %v810
        %1200 = vst.msk [vmem:[%s369 + $0x6] sm:$0x3] %vm1196, %v812
        %1201 = vst.msk [vmem:[%s369 + $0x8] sm:$0x3] %vm1196, %v820
        %1202 = vst.msk [vmem:[%s369 + $0xa] sm:$0x3] %vm1196, %v828
        %1203 = vst.msk [vmem:[%s369 + $0xc] sm:$0x3] %vm1196, %v827
        %1204 = vst.msk [vmem:[%s369 + $0xe] sm:$0x3] %vm1196, %v829
        %v1208 = vunpack.c.l.s4 269488144
        %v1209 = vunpack.c.0.s8 %v1208
        %v1210 = vlaneseq
        %v1211 = vshrl.u32 %v1210, 7
        %v1212 = vsub.s32 %v1209, %v1211
        %v1213 = vrot.slane %v782, %v1212
        %v1215 = vunpack.c.l.s4 842150450
        %v1216 = vunpack.c.0.s8 %v1215
        %v1217 = vlaneseq
        %v1218 = vshrl.u32 %v1217, 7
        %v1219 = vsub.s32 %v1216, %v1218
        %v1220 = vrot.slane %v782, %v1219
        %v1222 = vunpack.c.l.s4 1414812756
        %v1223 = vunpack.c.0.s8 %v1222
        %v1224 = vlaneseq
        %v1225 = vshrl.u32 %v1224, 7
        %v1226 = vsub.s32 %v1223, %v1225
        %v1227 = vrot.slane %v782, %v1226
        %v1229 = vunpack.c.l.s4 1987475062
        %v1230 = vunpack.c.0.s8 %v1229
        %v1231 = vlaneseq
        %v1232 = vshrl.u32 %v1231, 7
        %v1233 = vsub.s32 %v1230, %v1232
        %v1234 = vrot.slane %v782, %v1233
        %v1236 = vunpack.c.l.s4 269488144
        %v1237 = vunpack.c.0.s8 %v1236
        %v1238 = vlaneseq
        %v1239 = vshrl.u32 %v1238, 7
        %v1240 = vsub.s32 %v1237, %v1239
        %v1241 = vrot.slane %v785, %v1240
        %v1243 = vunpack.c.l.s4 842150450
        %v1244 = vunpack.c.0.s8 %v1243
        %v1245 = vlaneseq
        %v1246 = vshrl.u32 %v1245, 7
        %v1247 = vsub.s32 %v1244, %v1246
        %v1248 = vrot.slane %v785, %v1247
        %v1250 = vunpack.c.l.s4 1414812756
        %v1251 = vunpack.c.0.s8 %v1250
        %v1252 = vlaneseq
        %v1253 = vshrl.u32 %v1252, 7
        %v1254 = vsub.s32 %v1251, %v1253
        %v1255 = vrot.slane %v785, %v1254
        %v1257 = vunpack.c.l.s4 1987475062
        %v1258 = vunpack.c.0.s8 %v1257
        %v1259 = vlaneseq
        %v1260 = vshrl.u32 %v1259, 7
        %v1261 = vsub.s32 %v1258, %v1260
        %v1262 = vrot.slane %v785, %v1261
        %vm1271 = vcmask 1024
        %1272 = vst.msk [vmem:[%s385] sm:$0x3] %vm1271, %v1213
        %1273 = vst.msk [vmem:[%s385 + $0x4] sm:$0x3] %vm1271, %v1220
        %1274 = vst.msk [vmem:[%s385 + $0x8] sm:$0x3] %vm1271, %v1227
        %1275 = vst.msk [vmem:[%s385 + $0xc] sm:$0x3] %vm1271, %v1234
        %1276 = vst.msk [vmem:[%s385 + $0x10] sm:$0x3] %vm1271, %v1241
        %1277 = vst.msk [vmem:[%s385 + $0x14] sm:$0x3] %vm1271, %v1248
        %1278 = vst.msk [vmem:[%s385 + $0x18] sm:$0x3] %vm1271, %v1255
        %1279 = vst.msk [vmem:[%s385 + $0x1c] sm:$0x3] %vm1271, %v1262
        %v1283 = vunpack.c.l.s4 269488144
        %v1284 = vunpack.c.0.s8 %v1283
        %v1285 = vlaneseq
        %v1286 = vshrl.u32 %v1285, 7
        %v1287 = vsub.s32 %v1284, %v1286
        %v1288 = vrot.slane %v790, %v1287
        %v1290 = vunpack.c.l.s4 842150450
        %v1291 = vunpack.c.0.s8 %v1290
        %v1292 = vlaneseq
        %v1293 = vshrl.u32 %v1292, 7
        %v1294 = vsub.s32 %v1291, %v1293
        %v1295 = vrot.slane %v790, %v1294
        %v1297 = vunpack.c.l.s4 1414812756
        %v1298 = vunpack.c.0.s8 %v1297
        %v1299 = vlaneseq
        %v1300 = vshrl.u32 %v1299, 7
        %v1301 = vsub.s32 %v1298, %v1300
        %v1302 = vrot.slane %v790, %v1301
        %v1304 = vunpack.c.l.s4 1987475062
        %v1305 = vunpack.c.0.s8 %v1304
        %v1306 = vlaneseq
        %v1307 = vshrl.u32 %v1306, 7
        %v1308 = vsub.s32 %v1305, %v1307
        %v1309 = vrot.slane %v790, %v1308
        %v1311 = vunpack.c.l.s4 269488144
        %v1312 = vunpack.c.0.s8 %v1311
        %v1313 = vlaneseq
        %v1314 = vshrl.u32 %v1313, 7
        %v1315 = vsub.s32 %v1312, %v1314
        %v1316 = vrot.slane %v793, %v1315
        %v1318 = vunpack.c.l.s4 842150450
        %v1319 = vunpack.c.0.s8 %v1318
        %v1320 = vlaneseq
        %v1321 = vshrl.u32 %v1320, 7
        %v1322 = vsub.s32 %v1319, %v1321
        %v1323 = vrot.slane %v793, %v1322
        %v1325 = vunpack.c.l.s4 1414812756
        %v1326 = vunpack.c.0.s8 %v1325
        %v1327 = vlaneseq
        %v1328 = vshrl.u32 %v1327, 7
        %v1329 = vsub.s32 %v1326, %v1328
        %v1330 = vrot.slane %v793, %v1329
        %v1332 = vunpack.c.l.s4 1987475062
        %v1333 = vunpack.c.0.s8 %v1332
        %v1334 = vlaneseq
        %v1335 = vshrl.u32 %v1334, 7
        %v1336 = vsub.s32 %v1333, %v1335
        %v1337 = vrot.slane %v793, %v1336
        %1346 = vst.msk [vmem:[%s385 + $0x2] sm:$0x3] %vm1271, %v1288
        %1347 = vst.msk [vmem:[%s385 + $0x6] sm:$0x3] %vm1271, %v1295
        %1348 = vst.msk [vmem:[%s385 + $0xa] sm:$0x3] %vm1271, %v1302
        %1349 = vst.msk [vmem:[%s385 + $0xe] sm:$0x3] %vm1271, %v1309
        %1350 = vst.msk [vmem:[%s385 + $0x12] sm:$0x3] %vm1271, %v1316
        %1351 = vst.msk [vmem:[%s385 + $0x16] sm:$0x3] %vm1271, %v1323
        %1352 = vst.msk [vmem:[%s385 + $0x1a] sm:$0x3] %vm1271, %v1330
        %1353 = vst.msk [vmem:[%s385 + $0x1e] sm:$0x3] %vm1271, %v1337
        %s1354 = sand.u32 %s144, 1
        %s1355 = scalar_lea.sflag [#allocation4], %s1354
        %s1356 = sand.u32 %s144, 1
        %s1357 = smul.addr %s1356, 16
        %s1358 = scalar_lea.vmem [#allocation3], %s1357
        %s1359 = sand.u32 %s26, 1
        %s1360 = scalar_lea.sflag [#allocation6], %s1359
        %s1361 = sand.u32 %s170, 1
        %s1362 = smul.addr %s1361, 16
        %s1363 = scalar_lea.vmem [#allocation5], %s1362
        %s1364 = sand.u32 %s26, 1
        %s1365 = scalar_lea.sflag [#allocation6], %s1364
        %s1366 = sand.u32 %s196, 1
        %s1367 = smul.addr %s1366, 16
        %s1368 = scalar_lea.vmem [#allocation7], %s1367
        %s1369 = smul.u32 8, %s26
        %p1370 = scmp.lt.s32.totalorder %s1369, 15
        %s1371 = scalar_select %p1370, %s1369, 15
        %s1372 = smul.addr %s1371, 4
        %s1373 = scalar_lea.vmem %s8, %s1372
        // Predicated region
        $region79: #{tpu_custom_call.1} parent=73 // pred_check
          %p1374 = pneg %p154
        $region80: #{tpu_custom_call.1} parent=73 // pred_check_branch
          %1376 = sbr.rel (%p1374) target = $region82
        $region81: #{tpu_custom_call.1} parent=73 // pred_region
          %s1377 = smul.u32 8, %s26
          %s1379 = ssub.s32 256, 256
          %1380 = vsyncadd %s1355, %s1379
          %s1381 = smul.addr %s1377, 32
          %s1382 = scalar_lea.hbm %s5, %s1381
          %s1383 = sshll.u32 %s1358, 4
          %s1384 = int_to_ptr.vmem [resolvable:$true] %s1383
          %1389 = dma.vmem_to_hbm [thread:$0]  %s1384, 256, %s1382, %s1355, 32, 32, 2
        $region82: #{tpu_custom_call.1} parent=73 // pred_fallthru
          _
        // Predicated region
        $region83: #{tpu_custom_call.1} parent=73 // pred_check
          %p1390 = pneg %p180
        $region84: #{tpu_custom_call.1} parent=73 // pred_check_branch
          %1392 = sbr.rel (%p1390) target = $region86
        $region85: #{tpu_custom_call.1} parent=73 // pred_region
          %s1393 = smul.u32 8, %s26
          %s1395 = ssub.s32 256, 256
          %1396 = vsyncadd %s1360, %s1395
          %s1397 = smul.addr %s1393, 32
          %s1398 = scalar_lea.hbm %s6, %s1397
          %s1399 = sshll.u32 %s1363, 4
          %s1400 = int_to_ptr.vmem [resolvable:$true] %s1399
          %1405 = dma.vmem_to_hbm [thread:$0]  %s1400, 256, %s1398, %s1360, 32, 32, 2
        $region86: #{tpu_custom_call.1} parent=73 // pred_fallthru
          _
        // Predicated region
        $region87: #{tpu_custom_call.1} parent=73 // pred_check
          %p1406 = pneg %p206
        $region88: #{tpu_custom_call.1} parent=73 // pred_check_branch
          %1408 = sbr.rel (%p1406) target = $region90
        $region89: #{tpu_custom_call.1} parent=73 // pred_region
          %s1409 = smul.u32 8, %s26
          %s1411 = ssub.s32 256, 256
          %1412 = vsyncadd %s1365, %s1411
          %s1413 = smul.addr %s1409, 32
          %s1414 = scalar_lea.hbm %s7, %s1413
          %s1415 = sshll.u32 %s1368, 4
          %s1416 = int_to_ptr.vmem [resolvable:$true] %s1415
          %1421 = dma.vmem_to_hbm [thread:$0]  %s1416, 256, %s1414, %s1365, 32, 32, 2
        $region90: #{tpu_custom_call.1} parent=73 // pred_fallthru
          _
        // Predicated region
        $region91: #{tpu_custom_call.1} parent=73 // pred_check
          %p1422 = pneg %p232
        $region92: #{tpu_custom_call.1} parent=73 // pred_check_branch
          %1424 = sbr.rel (%p1422) target = $region94
        $region93: #{tpu_custom_call.1} parent=73 // pred_region
          %s1425 = smul.u32 8, %s26
        $region94: #{tpu_custom_call.1} parent=73 // pred_fallthru
          _
      $region74: #{tpu_custom_call.1} parent=5 // pred_fallthru
        _
      %p1426 = scmp.le.s32.totalorder 2, %s21
      // Predicated region
      $region95: #{tpu_custom_call.1} parent=5 // pred_check
        %p1427 = pneg %p1426
      $region96: #{tpu_custom_call.1} parent=5 // pred_check_branch
        %1429 = sbr.rel (%p1427) target = $region98
      $region97: #{tpu_custom_call.1} parent=5 // pred_region
        %s1430 = ssub.s32 %s21, 2
        // Predicated region
        $region99: #{tpu_custom_call.1} parent=97 // pred_check
          %p1431 = pneg %p160
        $region100: #{tpu_custom_call.1} parent=97 // pred_check_branch
          %1433 = sbr.rel (%p1431) target = $region102
        $region101: #{tpu_custom_call.1} parent=97 // pred_region
          %s1434 = sand.u32 %s145, 1
          %s1435 = scalar_lea.sflag [#allocation4], %s1434
          %s1436 = sand.u32 %s145, 1
          %s1437 = smul.addr %s1436, 16
          %s1438 = scalar_lea.vmem [#allocation3], %s1437
          %1439 = dma.done %s1435, 256
        $region102: #{tpu_custom_call.1} parent=97 // pred_fallthru
          _
        // Predicated region
        $region103: #{tpu_custom_call.1} parent=97 // pred_check
          %p1440 = pneg %p186
        $region104: #{tpu_custom_call.1} parent=97 // pred_check_branch
          %1442 = sbr.rel (%p1440) target = $region106
        $region105: #{tpu_custom_call.1} parent=97 // pred_region
          %s1443 = sand.u32 %s27, 1
          %s1444 = scalar_lea.sflag [#allocation6], %s1443
          %s1445 = sand.u32 %s171, 1
          %s1446 = smul.addr %s1445, 16
          %s1447 = scalar_lea.vmem [#allocation5], %s1446
          %1448 = dma.done %s1444, 256
        $region106: #{tpu_custom_call.1} parent=97 // pred_fallthru
          _
        // Predicated region
        $region107: #{tpu_custom_call.1} parent=97 // pred_check
          %p1449 = pneg %p212
        $region108: #{tpu_custom_call.1} parent=97 // pred_check_branch
          %1451 = sbr.rel (%p1449) target = $region110
        $region109: #{tpu_custom_call.1} parent=97 // pred_region
          %s1452 = sand.u32 %s27, 1
          %s1453 = scalar_lea.sflag [#allocation6], %s1452
          %s1454 = sand.u32 %s197, 1
          %s1455 = smul.addr %s1454, 16
          %s1456 = scalar_lea.vmem [#allocation7], %s1455
          %1457 = dma.done %s1453, 256
        $region110: #{tpu_custom_call.1} parent=97 // pred_fallthru
          _
        // Predicated region
        $region111: #{tpu_custom_call.1} parent=97 // pred_check
          %p1458 = pneg %p238
        $region112: #{tpu_custom_call.1} parent=97 // pred_check_branch
          %1460 = sbr.rel (%p1458) target = $region114
        $region113: #{tpu_custom_call.1} parent=97 // pred_region
          %s1461 = smul.u32 8, %s27
          %p1462 = scmp.lt.s32.totalorder %s1461, 15
          %s1463 = scalar_select %p1462, %s1461, 15
          %s1464 = smul.addr %s1463, 4
          %s1465 = scalar_lea.vmem %s8, %s1464
        $region114: #{tpu_custom_call.1} parent=97 // pred_fallthru
          _
      $region98: #{tpu_custom_call.1} parent=5 // pred_fallthru
        _
    $region6: #{tpu_custom_call.1} parent=1 // loop_footer
      %s25 = sadd.s32 1, %s21
    $region7: #{tpu_custom_call.1} parent=1 // loop_footer_branch
      %20 = sbr.rel target = $region3
    $region8: #{tpu_custom_call.1} parent=1 // loop_exit
      _
    %1466 = vsyncpa [#allocation4], 1
    %s1467 = scalar_lea.sflag [#allocation4], 1
    %1468 = vsyncpa %s1467, 1
    %1469 = vsyncpa [#allocation6], 1
    %s1470 = scalar_lea.sflag [#allocation6], 1
    %1471 = vsyncpa %s1470, 1

</llo_original>
